<compile_context>
chip_gen: v6e
topology: v6e:2x2x1
jax: 0.10.0
libtpu: 0.0.40
codegen_flags: <defaults>
</compile_context>

<pallas_src>
import functools

import jax
import jax.numpy as jnp
from jax.experimental import pallas as pl
from jax.experimental.pallas import tpu as pltpu


def _layernorm(x, g, b, eps=1e-5):
    # x: (rows, D) f32; g/b: (1, D) f32; biased variance, matching nn.LayerNorm
    mu = jnp.mean(x, axis=-1, keepdims=True)
    var = jnp.mean((x - mu) ** 2, axis=-1, keepdims=True)
    return (x - mu) * jax.lax.rsqrt(var + eps) * g + b


def transformer_layer_kernel(
    x_ref,                                                     # (Bt, N, D) input
    ln1_g_ref, ln1_b_ref, wqkv_ref, bqkv_ref, wout_ref, bout_ref,
    ln2_g_ref, ln2_b_ref, w1_ref, b1_ref, w2_ref, b2_ref,
    o_ref,                                                     # (Bt, N, D) output
    x_carry,                                                   # VMEM (Bt, N, D) f32 carry
    *, heads, dim_head, q_chunk, gelu_approximate,
):
    d = pl.program_id(1)
    bf16 = jnp.bfloat16
    Bt, N, D = x_ref.shape
    inner = heads * dim_head
    rows = Bt * N

    @pl.when(d == 0)
    def _():
        x_carry[...] = x_ref[...].astype(jnp.float32)

    x = x_carry[...].reshape(rows, D)                          # flatten batch into matmul rows

    # ---- PreNorm(Attention) + residual ----
    h = _layernorm(x, ln1_g_ref[...], ln1_b_ref[...])
    qkv = jnp.dot(h.astype(bf16), wqkv_ref[...],
                  preferred_element_type=jnp.float32) + bqkv_ref[...]   # (rows, 3*inner)

    n_chunks = max(1, (N + q_chunk - 1) // q_chunk)
    head_outs = []
    for hi in range(heads):
        # q scale already folded into wqkv/bqkv columns at prep time
        q_h = qkv[:, 0 * inner + hi * dim_head: 0 * inner + (hi + 1) * dim_head]
        k_h = qkv[:, 1 * inner + hi * dim_head: 1 * inner + (hi + 1) * dim_head]
        v_h = qkv[:, 2 * inner + hi * dim_head: 2 * inner + (hi + 1) * dim_head]
        q_h = q_h.reshape(Bt, N, dim_head).astype(bf16)
        k_h = k_h.reshape(Bt, N, dim_head).astype(bf16)
        v_h = v_h.reshape(Bt, N, dim_head).astype(bf16)

        # Query-chunked attention: bounds the f32 score tensor to (Bt, q_chunk, N).
        o_chunks = []
        for ci in range(n_chunks):
            s0 = ci * q_chunk
            s1 = min(N, s0 + q_chunk)
            qc = q_h[:, s0:s1, :]
            s = jnp.einsum("bqd,bkd->bqk", qc, k_h,
                           preferred_element_type=jnp.float32)
            s = s - jnp.max(s, axis=-1, keepdims=True)
            p = jnp.exp(s)
            p = p * pl.reciprocal(jnp.sum(p, axis=-1, keepdims=True), approx=True)
            oc = jnp.einsum("bqk,bkd->bqd", p.astype(bf16), v_h,
                            preferred_element_type=jnp.float32)
            o_chunks.append(oc.astype(bf16))
        o_h = o_chunks[0] if n_chunks == 1 else jnp.concatenate(o_chunks, axis=1)
        head_outs.append(o_h)                                  # (Bt, N, dh) bf16

    # Single lane-concat + ONE (rows, inner) @ (inner, D) output projection (K = inner).
    o_cat = head_outs[0] if heads == 1 else jnp.concatenate(head_outs, axis=-1)
    o_cat = o_cat.reshape(rows, inner)
    attn = jnp.dot(o_cat, wout_ref[...],
                   preferred_element_type=jnp.float32) + bout_ref[...]
    x = x + attn

    # ---- PreNorm(FeedForward) + residual ----
    h2 = _layernorm(x, ln2_g_ref[...], ln2_b_ref[...])
    u = jnp.dot(h2.astype(bf16), w1_ref[...],
                preferred_element_type=jnp.float32) + b1_ref[...]
    u = jax.nn.gelu(u, approximate=gelu_approximate)
    ff = jnp.dot(u.astype(bf16), w2_ref[...],
                 preferred_element_type=jnp.float32) + b2_ref[...]
    x = x + ff

    x_carry[...] = x.reshape(Bt, N, D)

    @pl.when(d == pl.num_programs(1) - 1)
    def _():
        o_ref[...] = x.reshape(Bt, N, D).astype(o_ref.dtype)


def prepare_params(params, *, depth, heads, dim_head):
    """One-time parameter preprocessing (do NOT redo per call):
    - matmul weights cast to bf16 for streaming, LN params / biases kept f32 as (depth,1,W)
    - 1/sqrt(dim_head) folded into the q columns of wqkv and bqkv."""
    inner = heads * dim_head
    scale = float(dim_head) ** -0.5
    wdt = jnp.bfloat16

    col_scale = jnp.ones((3 * inner,), jnp.float32).at[:inner].set(scale)
    wqkv = params["wqkv"].astype(jnp.float32) * col_scale[None, None, :]
    bqkv = params["bqkv"].astype(jnp.float32) * col_scale[None, :]

    def as_row(p):
        p = jnp.asarray(p, jnp.float32)
        return p.reshape(depth, 1, p.shape[-1])

    return [
        as_row(params["ln1_g"]), as_row(params["ln1_b"]),
        wqkv.astype(wdt),                       # (depth, D, 3*inner)
        as_row(bqkv),
        params["wout"].astype(wdt),             # (depth, inner, D)
        as_row(params["bout"]),
        as_row(params["ln2_g"]), as_row(params["ln2_b"]),
        params["w1"].astype(wdt),               # (depth, D, mlp)
        as_row(params["b1"]),
        params["w2"].astype(wdt),               # (depth, mlp, D)
        as_row(params["b2"]),
    ]


def _vmem_limit_bytes():
    try:
        kind = jax.devices()[0].device_kind.lower()
    except Exception:
        kind = ""
    if "v7" in kind:
        return 56 * 1024 * 1024      # v7x: 64 MiB physical VMEM, leave headroom
    return 100 * 1024 * 1024         # v5e/v6e: 128 MiB physical VMEM


def convenient_transformer(x, prepared_weights, *, depth, heads, dim_head,
                           num_batch_blocks=None, q_chunk=256, gelu_approximate=True):
    B, N, D = x.shape
    if num_batch_blocks is None:
        # keep a parallel axis of size >= 2 when possible (v7x megacore sharding),
        # while folding the rest of the batch into the block for weight amortization.
        num_batch_blocks = 2 if (B >= 2 and B % 2 == 0) else 1
    assert B % num_batch_blocks == 0, "batch must be divisible by num_batch_blocks"
    Bt = B // num_batch_blocks

    def layer_spec(arr):
        zeros = (0,) * (arr.ndim - 1)
        # Squeeze the leading depth dim; stream one layer's slice per depth grid step.
        return pl.BlockSpec((None,) + arr.shape[1:], lambda b, d: (d,) + zeros)

    kernel = functools.partial(
        transformer_layer_kernel, heads=heads, dim_head=dim_head,
        q_chunk=q_chunk, gelu_approximate=gelu_approximate)

    return pl.pallas_call(
        kernel,
        out_shape=jax.ShapeDtypeStruct((B, N, D), x.dtype),
        grid_spec=pltpu.PrefetchScalarGridSpec(
            num_scalar_prefetch=0,
            grid=(num_batch_blocks, depth),                 # depth innermost & sequential!
            in_specs=[pl.BlockSpec((Bt, N, D), lambda b, d: (b, 0, 0))]
                     + [layer_spec(w) for w in prepared_weights],
            out_specs=pl.BlockSpec((Bt, N, D), lambda b, d: (b, 0, 0)),
            scratch_shapes=[pltpu.VMEM((Bt, N, D), jnp.float32)],
        ),
        compiler_params=pltpu.CompilerParams(
            dimension_semantics=("parallel", "arbitrary"),
            vmem_limit_bytes=_vmem_limit_bytes()),
    )(x, *prepared_weights)


# -------------------- pure-JAX reference (module semantics: exact-erf GELU) --------------------
def reference_forward(x, params, *, depth, heads, dim_head):
    inner = heads * dim_head
    scale = 1.0 / (dim_head ** 0.5)
    B, N, D = x.shape
    y = x.astype(jnp.float32)
    for d in range(depth):
        g, b_ = params["ln1_g"][d], params["ln1_b"][d]
        mu = jnp.mean(y, -1, keepdims=True)
        var = jnp.mean((y - mu) ** 2, -1, keepdims=True)
        h = (y - mu) * jax.lax.rsqrt(var + 1e-5) * g + b_
        qkv = jnp.einsum("bnd,dk->bnk", h, params["wqkv"][d],
                         preferred_element_type=jnp.float32) + params["bqkv"][d]
        qkv = qkv.reshape(B, N, 3, heads, dim_head).transpose(2, 0, 3, 1, 4)
        q, k, v = qkv[0], qkv[1], qkv[2]                  # (B, H, N, dh)
        s = jnp.einsum("bhqd,bhkd->bhqk", q, k,
                       preferred_element_type=jnp.float32) * scale
        p = jax.nn.softmax(s, axis=-1)
        o = jnp.einsum("bhqk,bhkd->bhqd", p, v,
                       preferred_element_type=jnp.float32)
        o = o.transpose(0, 2, 1, 3).reshape(B, N, inner)
        attn = jnp.einsum("bni,id->bnd", o, params["wout"][d],
                          preferred_element_type=jnp.float32) + params["bout"][d]
        y = y + attn
        g2, b2_ = params["ln2_g"][d], params["ln2_b"][d]
        mu = jnp.mean(y, -1, keepdims=True)
        var = jnp.mean((y - mu) ** 2, -1, keepdims=True)
        h2 = (y - mu) * jax.lax.rsqrt(var + 1e-5) * g2 + b2_
        u = jnp.einsum("bnd,dm->bnm", h2, params["w1"][d],
                       preferred_element_type=jnp.float32) + params["b1"][d]
        u = jax.nn.gelu(u, approximate=False)
        ff = jnp.einsum("bnm,md->bnd", u, params["w2"][d],
                        preferred_element_type=jnp.float32) + params["b2"][d]
        y = y + ff
    return y.astype(x.dtype)


if __name__ == "__main__":
    # Small shapes consistent with the module: dim divisible by dim_head (heads = dim // dim_head).
    B, N = 4, 16
    dim, dim_head, depth = 128, 64, 2
    heads = dim // dim_head
    inner = heads * dim_head
    mlp_dim = dim * 4

    key = jax.random.PRNGKey(0)
    ks = jax.random.split(key, 16)

    def nrm(k, shape, scale=0.02):
        return (scale * jax.random.normal(k, shape)).astype(jnp.float32)

    params = {
        "ln1_g": 1.0 + nrm(ks[0], (depth, dim), 0.01),
        "ln1_b": nrm(ks[1], (depth, dim), 0.01),
        "wqkv":  nrm(ks[2], (depth, dim, 3 * inner)),
        "bqkv":  nrm(ks[3], (depth, 3 * inner), 0.01),
        "wout":  nrm(ks[4], (depth, inner, dim)),
        "bout":  nrm(ks[5], (depth, dim), 0.01),
        "ln2_g": 1.0 + nrm(ks[6], (depth, dim), 0.01),
        "ln2_b": nrm(ks[7], (depth, dim), 0.01),
        "w1":    nrm(ks[8], (depth, dim, mlp_dim)),
        "b1":    nrm(ks[9], (depth, mlp_dim), 0.01),
        "w2":    nrm(ks[10], (depth, mlp_dim, dim)),
        "b2":    nrm(ks[11], (depth, dim), 0.01),
    }

    x = jax.random.normal(ks[12], (B, N, dim), dtype=jnp.float32)

    prepared = prepare_params(params, depth=depth, heads=heads, dim_head=dim_head)
    out = convenient_transformer(x, prepared, depth=depth, heads=heads,
                                 dim_head=dim_head)
    out = jax.block_until_ready(out)

    ref = jax.block_until_ready(
        reference_forward(x, params, depth=depth, heads=heads, dim_head=dim_head))

    max_err = float(jnp.max(jnp.abs(out - ref)))
    assert out.shape == (B, N, dim)
    # bf16 matmul operands + approx reciprocal + tanh-GELU vs f32 exact reference
    assert max_err < 3e-2, f"mismatch vs reference: {max_err}"
    print("KERNEL_OK")
</pallas_src>

<mosaic_0001>
module attributes {stable_mosaic.version = 11 : i64} {
  func.func @transformer_layer_kernel(%arg0: i32, %arg1: i32, %arg2: memref<2x16x128xf32, #tpu.memory_space<vmem>>, %arg3: memref<1x1x128xf32, #tpu.memory_space<vmem>>, %arg4: memref<1x1x128xf32, #tpu.memory_space<vmem>>, %arg5: memref<1x128x384xbf16, #tpu.memory_space<vmem>>, %arg6: memref<1x1x384xf32, #tpu.memory_space<vmem>>, %arg7: memref<1x128x128xbf16, #tpu.memory_space<vmem>>, %arg8: memref<1x1x128xf32, #tpu.memory_space<vmem>>, %arg9: memref<1x1x128xf32, #tpu.memory_space<vmem>>, %arg10: memref<1x1x128xf32, #tpu.memory_space<vmem>>, %arg11: memref<1x128x512xbf16, #tpu.memory_space<vmem>>, %arg12: memref<1x1x512xf32, #tpu.memory_space<vmem>>, %arg13: memref<1x512x128xbf16, #tpu.memory_space<vmem>>, %arg14: memref<1x1x128xf32, #tpu.memory_space<vmem>>, %arg15: memref<2x16x128xf32, #tpu.memory_space<vmem>>, %arg16: memref<2x16x128xf32, #tpu.memory_space<vmem>>) attributes {dimension_semantics = [#tpu.dimension_semantics<parallel>, #tpu.dimension_semantics<arbitrary>], iteration_bounds = array<i64: 2, 2>, scalar_prefetch = 0 : i64, scratch_operands = 1 : i64, tpu.core_type = #tpu.core_type<tc>, window_params = [{transform_indices = @transform_0, window_bounds = array<i64: 2, 16, 128>}, {transform_indices = @transform_1, window_bounds = array<i64: 1, 1, 128>}, {transform_indices = @transform_2, window_bounds = array<i64: 1, 1, 128>}, {transform_indices = @transform_3, window_bounds = array<i64: 1, 128, 384>}, {transform_indices = @transform_4, window_bounds = array<i64: 1, 1, 384>}, {transform_indices = @transform_5, window_bounds = array<i64: 1, 128, 128>}, {transform_indices = @transform_6, window_bounds = array<i64: 1, 1, 128>}, {transform_indices = @transform_7, window_bounds = array<i64: 1, 1, 128>}, {transform_indices = @transform_8, window_bounds = array<i64: 1, 1, 128>}, {transform_indices = @transform_9, window_bounds = array<i64: 1, 128, 512>}, {transform_indices = @transform_10, window_bounds = array<i64: 1, 1, 512>}, {transform_indices = @transform_11, window_bounds = array<i64: 1, 512, 128>}, {transform_indices = @transform_12, window_bounds = array<i64: 1, 1, 128>}, {transform_indices = @transform_13, window_bounds = array<i64: 2, 16, 128>}]} {
    %c0_i32 = arith.constant 0 : i32
    %0 = arith.cmpi eq, %arg1, %c0_i32 : i32
    %1 = arith.extui %0 : i1 to i32
    %c0_i32_0 = arith.constant 0 : i32
    %2 = arith.cmpi ne, %1, %c0_i32_0 : i32
    scf.if %2 {
      %c0_68 = arith.constant 0 : index
      %c0_69 = arith.constant 0 : index
      %c0_70 = arith.constant 0 : index
      %156 = vector.load %arg2[%c0_68, %c0_69, %c0_70] : memref<2x16x128xf32, #tpu.memory_space<vmem>>, vector<2x16x128xf32>
      %c0_71 = arith.constant 0 : index
      %c0_72 = arith.constant 0 : index
      %c0_73 = arith.constant 0 : index
      %157 = vector.load %arg16[%c0_71, %c0_72, %c0_73] : memref<2x16x128xf32, #tpu.memory_space<vmem>>, vector<2x16x128xf32>
      tpu.vector_store %arg16[%c0_71, %c0_72, %c0_73], %156 {strides = array<i32>} : memref<2x16x128xf32, #tpu.memory_space<vmem>>, vector<2x16x128xf32>,
    } else {
    }
    %c0 = arith.constant 0 : index
    %c0_1 = arith.constant 0 : index
    %c0_2 = arith.constant 0 : index
    %3 = vector.load %arg16[%c0, %c0_1, %c0_2] : memref<2x16x128xf32, #tpu.memory_space<vmem>>, vector<2x16x128xf32>
    %4 = vector.shape_cast %3 : vector<2x16x128xf32> to vector<32x128xf32>
    %c0_3 = arith.constant 0 : index
    %c0_4 = arith.constant 0 : index
    %c0_5 = arith.constant 0 : index
    %5 = vector.load %arg3[%c0_3, %c0_4, %c0_5] : memref<1x1x128xf32, #tpu.memory_space<vmem>>, vector<1x1x128xf32>
    %6 = vector.shape_cast %5 : vector<1x1x128xf32> to vector<1x128xf32>
    %c0_6 = arith.constant 0 : index
    %c0_7 = arith.constant 0 : index
    %c0_8 = arith.constant 0 : index
    %7 = vector.load %arg4[%c0_6, %c0_7, %c0_8] : memref<1x1x128xf32, #tpu.memory_space<vmem>>, vector<1x1x128xf32>
    %8 = vector.shape_cast %7 : vector<1x1x128xf32> to vector<1x128xf32>
    %cst = arith.constant dense<0.000000e+00> : vector<32xf32>
    %9 = vector.multi_reduction <add>, %4, %cst [1] : vector<32x128xf32> to vector<32xf32>
    %10 = vector.shape_cast %9 : vector<32xf32> to vector<32x1xf32>
    %cst_9 = arith.constant 1.280000e+02 : f32
    %11 = vector.broadcast %cst_9 : f32 to vector<32x1xf32>
    %12 = arith.divf %10, %11 : vector<32x1xf32>
    %13 = vector.broadcast %12 : vector<32x1xf32> to vector<32x128xf32>
    %14 = arith.subf %4, %13 : vector<32x128xf32>
    %15 = arith.mulf %14, %14 : vector<32x128xf32>
    %cst_10 = arith.constant dense<0.000000e+00> : vector<32xf32>
    %16 = vector.multi_reduction <add>, %15, %cst_10 [1] : vector<32x128xf32> to vector<32xf32>
    %17 = vector.shape_cast %16 : vector<32xf32> to vector<32x1xf32>
    %cst_11 = arith.constant 1.280000e+02 : f32
    %18 = vector.broadcast %cst_11 : f32 to vector<32x1xf32>
    %19 = arith.divf %17, %18 : vector<32x1xf32>
    %20 = vector.broadcast %12 : vector<32x1xf32> to vector<32x128xf32>
    %21 = arith.subf %4, %20 : vector<32x128xf32>
    %cst_12 = arith.constant 9.99999974E-6 : f32
    %22 = vector.broadcast %cst_12 : f32 to vector<32x1xf32>
    %23 = arith.addf %19, %22 : vector<32x1xf32>
    %24 = math.rsqrt %23 : vector<32x1xf32>
    %25 = vector.broadcast %24 : vector<32x1xf32> to vector<32x128xf32>
    %26 = arith.mulf %21, %25 : vector<32x128xf32>
    %27 = vector.broadcast %6 : vector<1x128xf32> to vector<32x128xf32>
    %28 = arith.mulf %26, %27 : vector<32x128xf32>
    %29 = vector.broadcast %8 : vector<1x128xf32> to vector<32x128xf32>
    %30 = arith.addf %28, %29 : vector<32x128xf32>
    %31 = arith.truncf %30 : vector<32x128xf32> to vector<32x128xbf16>
    %c0_13 = arith.constant 0 : index
    %c0_14 = arith.constant 0 : index
    %c0_15 = arith.constant 0 : index
    %32 = vector.load %arg5[%c0_13, %c0_14, %c0_15] : memref<1x128x384xbf16, #tpu.memory_space<vmem>>, vector<1x128x384xbf16>
    %33 = vector.shape_cast %32 : vector<1x128x384xbf16> to vector<128x384xbf16>
    %cst_16 = arith.constant dense<0.000000e+00> : vector<32x384xf32>
    %34 = tpu.matmul %31, %33, %cst_16 {dimension_numbers = #tpu.dot_dimension_numbers<[1], [0], [0], [1], [0, 0, 1, 1], [], []>} : vector<32x128xbf16>, vector<128x384xbf16>, vector<32x384xf32> -> vector<32x384xf32>
    %c0_17 = arith.constant 0 : index
    %c0_18 = arith.constant 0 : index
    %c0_19 = arith.constant 0 : index
    %35 = vector.load %arg6[%c0_17, %c0_18, %c0_19] : memref<1x1x384xf32, #tpu.memory_space<vmem>>, vector<1x1x384xf32>
    %36 = vector.shape_cast %35 : vector<1x1x384xf32> to vector<1x384xf32>
    %37 = vector.broadcast %36 : vector<1x384xf32> to vector<32x384xf32>
    %38 = arith.addf %34, %37 : vector<32x384xf32>
    %39 = vector.extract_strided_slice %38 {offsets = [0, 0], sizes = [32, 64], strides = [1, 1]} : vector<32x384xf32> to vector<32x64xf32>
    %40 = vector.extract_strided_slice %38 {offsets = [0, 128], sizes = [32, 64], strides = [1, 1]} : vector<32x384xf32> to vector<32x64xf32>
    %41 = vector.extract_strided_slice %38 {offsets = [0, 256], sizes = [32, 64], strides = [1, 1]} : vector<32x384xf32> to vector<32x64xf32>
    %42 = vector.shape_cast %39 : vector<32x64xf32> to vector<2x16x64xf32>
    %43 = arith.truncf %42 : vector<2x16x64xf32> to vector<2x16x64xbf16>
    %44 = vector.shape_cast %40 : vector<32x64xf32> to vector<2x16x64xf32>
    %45 = arith.truncf %44 : vector<2x16x64xf32> to vector<2x16x64xbf16>
    %46 = vector.shape_cast %41 : vector<32x64xf32> to vector<2x16x64xf32>
    %47 = arith.truncf %46 : vector<2x16x64xf32> to vector<2x16x64xbf16>
    "tpu.trace_start"() <{level = 10 : i32, message = "bqd,bkd->bqk"}> : () -> ()
    %cst_20 = arith.constant dense<0.000000e+00> : vector<2x16x16xf32>
    %48 = tpu.matmul %43, %45, %cst_20 {dimension_numbers = #tpu.dot_dimension_numbers<[2], [2], [1], [1], [0, 0, 0, 1, 1, 1], [0], [0]>} : vector<2x16x64xbf16>, vector<2x16x64xbf16>, vector<2x16x16xf32> -> vector<2x16x16xf32>
    "tpu.trace_stop"() : () -> ()
    %cst_21 = arith.constant dense<0xFF800000> : vector<2x16xf32>
    %49 = vector.multi_reduction <maximumf>, %48, %cst_21 [2] : vector<2x16x16xf32> to vector<2x16xf32>
    %50 = vector.shape_cast %49 : vector<2x16xf32> to vector<2x16x1xf32>
    %51 = vector.broadcast %50 : vector<2x16x1xf32> to vector<2x16x16xf32>
    %52 = arith.subf %48, %51 : vector<2x16x16xf32>
    %53 = math.exp %52 : vector<2x16x16xf32>
    %cst_22 = arith.constant dense<0.000000e+00> : vector<2x16xf32>
    %54 = vector.multi_reduction <add>, %53, %cst_22 [2] : vector<2x16x16xf32> to vector<2x16xf32>
    %55 = vector.shape_cast %54 : vector<2x16xf32> to vector<2x16x1xf32>
    %56 = tpu.reciprocal %55 {approx = true} : vector<2x16x1xf32> -> vector<2x16x1xf32>
    %57 = vector.broadcast %56 : vector<2x16x1xf32> to vector<2x16x16xf32>
    %58 = arith.mulf %53, %57 : vector<2x16x16xf32>
    %59 = arith.truncf %58 : vector<2x16x16xf32> to vector<2x16x16xbf16>
    "tpu.trace_start"() <{level = 10 : i32, message = "bqk,bkd->bqd"}> : () -> ()
    %cst_23 = arith.constant dense<0.000000e+00> : vector<2x16x64xf32>
    %60 = tpu.matmul %59, %47, %cst_23 {dimension_numbers = #tpu.dot_dimension_numbers<[2], [1], [1], [2], [0, 0, 0, 1, 1, 2], [0], [0]>} : vector<2x16x16xbf16>, vector<2x16x64xbf16>, vector<2x16x64xf32> -> vector<2x16x64xf32>
    "tpu.trace_stop"() : () -> ()
    %61 = arith.truncf %60 : vector<2x16x64xf32> to vector<2x16x64xbf16>
    %62 = vector.extract_strided_slice %38 {offsets = [0, 64], sizes = [32, 64], strides = [1, 1]} : vector<32x384xf32> to vector<32x64xf32>
    %63 = vector.extract_strided_slice %38 {offsets = [0, 192], sizes = [32, 64], strides = [1, 1]} : vector<32x384xf32> to vector<32x64xf32>
    %64 = vector.extract_strided_slice %38 {offsets = [0, 320], sizes = [32, 64], strides = [1, 1]} : vector<32x384xf32> to vector<32x64xf32>
    %65 = vector.shape_cast %62 : vector<32x64xf32> to vector<2x16x64xf32>
    %66 = arith.truncf %65 : vector<2x16x64xf32> to vector<2x16x64xbf16>
    %67 = vector.shape_cast %63 : vector<32x64xf32> to vector<2x16x64xf32>
    %68 = arith.truncf %67 : vector<2x16x64xf32> to vector<2x16x64xbf16>
    %69 = vector.shape_cast %64 : vector<32x64xf32> to vector<2x16x64xf32>
    %70 = arith.truncf %69 : vector<2x16x64xf32> to vector<2x16x64xbf16>
    "tpu.trace_start"() <{level = 10 : i32, message = "bqd,bkd->bqk"}> : () -> ()
    %cst_24 = arith.constant dense<0.000000e+00> : vector<2x16x16xf32>
    %71 = tpu.matmul %66, %68, %cst_24 {dimension_numbers = #tpu.dot_dimension_numbers<[2], [2], [1], [1], [0, 0, 0, 1, 1, 1], [0], [0]>} : vector<2x16x64xbf16>, vector<2x16x64xbf16>, vector<2x16x16xf32> -> vector<2x16x16xf32>
    "tpu.trace_stop"() : () -> ()
    %cst_25 = arith.constant dense<0xFF800000> : vector<2x16xf32>
    %72 = vector.multi_reduction <maximumf>, %71, %cst_25 [2] : vector<2x16x16xf32> to vector<2x16xf32>
    %73 = vector.shape_cast %72 : vector<2x16xf32> to vector<2x16x1xf32>
    %74 = vector.broadcast %73 : vector<2x16x1xf32> to vector<2x16x16xf32>
    %75 = arith.subf %71, %74 : vector<2x16x16xf32>
    %76 = math.exp %75 : vector<2x16x16xf32>
    %cst_26 = arith.constant dense<0.000000e+00> : vector<2x16xf32>
    %77 = vector.multi_reduction <add>, %76, %cst_26 [2] : vector<2x16x16xf32> to vector<2x16xf32>
    %78 = vector.shape_cast %77 : vector<2x16xf32> to vector<2x16x1xf32>
    %79 = tpu.reciprocal %78 {approx = true} : vector<2x16x1xf32> -> vector<2x16x1xf32>
    %80 = vector.broadcast %79 : vector<2x16x1xf32> to vector<2x16x16xf32>
    %81 = arith.mulf %76, %80 : vector<2x16x16xf32>
    %82 = arith.truncf %81 : vector<2x16x16xf32> to vector<2x16x16xbf16>
    "tpu.trace_start"() <{level = 10 : i32, message = "bqk,bkd->bqd"}> : () -> ()
    %cst_27 = arith.constant dense<0.000000e+00> : vector<2x16x64xf32>
    %83 = tpu.matmul %82, %70, %cst_27 {dimension_numbers = #tpu.dot_dimension_numbers<[2], [1], [1], [2], [0, 0, 0, 1, 1, 2], [0], [0]>} : vector<2x16x16xbf16>, vector<2x16x64xbf16>, vector<2x16x64xf32> -> vector<2x16x64xf32>
    "tpu.trace_stop"() : () -> ()
    %84 = arith.truncf %83 : vector<2x16x64xf32> to vector<2x16x64xbf16>
    %85 = tpu.concatenate %61, %84 in 2 : vector<2x16x64xbf16>, vector<2x16x64xbf16> -> vector<2x16x128xbf16>
    %86 = vector.shape_cast %85 : vector<2x16x128xbf16> to vector<32x128xbf16>
    %c0_28 = arith.constant 0 : index
    %c0_29 = arith.constant 0 : index
    %c0_30 = arith.constant 0 : index
    %87 = vector.load %arg7[%c0_28, %c0_29, %c0_30] : memref<1x128x128xbf16, #tpu.memory_space<vmem>>, vector<1x128x128xbf16>
    %88 = vector.shape_cast %87 : vector<1x128x128xbf16> to vector<128x128xbf16>
    %cst_31 = arith.constant dense<0.000000e+00> : vector<32x128xf32>
    %89 = tpu.matmul %86, %88, %cst_31 {dimension_numbers = #tpu.dot_dimension_numbers<[1], [0], [0], [1], [0, 0, 1, 1], [], []>} : vector<32x128xbf16>, vector<128x128xbf16>, vector<32x128xf32> -> vector<32x128xf32>
    %c0_32 = arith.constant 0 : index
    %c0_33 = arith.constant 0 : index
    %c0_34 = arith.constant 0 : index
    %90 = vector.load %arg8[%c0_32, %c0_33, %c0_34] : memref<1x1x128xf32, #tpu.memory_space<vmem>>, vector<1x1x128xf32>
    %91 = vector.shape_cast %90 : vector<1x1x128xf32> to vector<1x128xf32>
    %92 = vector.broadcast %91 : vector<1x128xf32> to vector<32x128xf32>
    %93 = arith.addf %89, %92 : vector<32x128xf32>
    %94 = arith.addf %4, %93 : vector<32x128xf32>
    %c0_35 = arith.constant 0 : index
    %c0_36 = arith.constant 0 : index
    %c0_37 = arith.constant 0 : index
    %95 = vector.load %arg9[%c0_35, %c0_36, %c0_37] : memref<1x1x128xf32, #tpu.memory_space<vmem>>, vector<1x1x128xf32>
    %96 = vector.shape_cast %95 : vector<1x1x128xf32> to vector<1x128xf32>
    %c0_38 = arith.constant 0 : index
    %c0_39 = arith.constant 0 : index
    %c0_40 = arith.constant 0 : index
    %97 = vector.load %arg10[%c0_38, %c0_39, %c0_40] : memref<1x1x128xf32, #tpu.memory_space<vmem>>, vector<1x1x128xf32>
    %98 = vector.shape_cast %97 : vector<1x1x128xf32> to vector<1x128xf32>
    %cst_41 = arith.constant dense<0.000000e+00> : vector<32xf32>
    %99 = vector.multi_reduction <add>, %94, %cst_41 [1] : vector<32x128xf32> to vector<32xf32>
    %100 = vector.shape_cast %99 : vector<32xf32> to vector<32x1xf32>
    %cst_42 = arith.constant 1.280000e+02 : f32
    %101 = vector.broadcast %cst_42 : f32 to vector<32x1xf32>
    %102 = arith.divf %100, %101 : vector<32x1xf32>
    %103 = vector.broadcast %102 : vector<32x1xf32> to vector<32x128xf32>
    %104 = arith.subf %94, %103 : vector<32x128xf32>
    %105 = arith.mulf %104, %104 : vector<32x128xf32>
    %cst_43 = arith.constant dense<0.000000e+00> : vector<32xf32>
    %106 = vector.multi_reduction <add>, %105, %cst_43 [1] : vector<32x128xf32> to vector<32xf32>
    %107 = vector.shape_cast %106 : vector<32xf32> to vector<32x1xf32>
    %cst_44 = arith.constant 1.280000e+02 : f32
    %108 = vector.broadcast %cst_44 : f32 to vector<32x1xf32>
    %109 = arith.divf %107, %108 : vector<32x1xf32>
    %110 = vector.broadcast %102 : vector<32x1xf32> to vector<32x128xf32>
    %111 = arith.subf %94, %110 : vector<32x128xf32>
    %cst_45 = arith.constant 9.99999974E-6 : f32
    %112 = vector.broadcast %cst_45 : f32 to vector<32x1xf32>
    %113 = arith.addf %109, %112 : vector<32x1xf32>
    %114 = math.rsqrt %113 : vector<32x1xf32>
    %115 = vector.broadcast %114 : vector<32x1xf32> to vector<32x128xf32>
    %116 = arith.mulf %111, %115 : vector<32x128xf32>
    %117 = vector.broadcast %96 : vector<1x128xf32> to vector<32x128xf32>
    %118 = arith.mulf %116, %117 : vector<32x128xf32>
    %119 = vector.broadcast %98 : vector<1x128xf32> to vector<32x128xf32>
    %120 = arith.addf %118, %119 : vector<32x128xf32>
    %121 = arith.truncf %120 : vector<32x128xf32> to vector<32x128xbf16>
    %c0_46 = arith.constant 0 : index
    %c0_47 = arith.constant 0 : index
    %c0_48 = arith.constant 0 : index
    %122 = vector.load %arg11[%c0_46, %c0_47, %c0_48] : memref<1x128x512xbf16, #tpu.memory_space<vmem>>, vector<1x128x512xbf16>
    %123 = vector.shape_cast %122 : vector<1x128x512xbf16> to vector<128x512xbf16>
    %cst_49 = arith.constant dense<0.000000e+00> : vector<32x512xf32>
    %124 = tpu.matmul %121, %123, %cst_49 {dimension_numbers = #tpu.dot_dimension_numbers<[1], [0], [0], [1], [0, 0, 1, 1], [], []>} : vector<32x128xbf16>, vector<128x512xbf16>, vector<32x512xf32> -> vector<32x512xf32>
    %c0_50 = arith.constant 0 : index
    %c0_51 = arith.constant 0 : index
    %c0_52 = arith.constant 0 : index
    %125 = vector.load %arg12[%c0_50, %c0_51, %c0_52] : memref<1x1x512xf32, #tpu.memory_space<vmem>>, vector<1x1x512xf32>
    %126 = vector.shape_cast %125 : vector<1x1x512xf32> to vector<1x512xf32>
    %127 = vector.broadcast %126 : vector<1x512xf32> to vector<32x512xf32>
    %128 = arith.addf %124, %127 : vector<32x512xf32>
    %129 = arith.mulf %128, %128 : vector<32x512xf32>
    %130 = arith.mulf %128, %129 : vector<32x512xf32>
    %cst_53 = arith.constant 4.471500e-02 : f32
    %131 = vector.broadcast %cst_53 : f32 to vector<32x512xf32>
    %132 = arith.mulf %131, %130 : vector<32x512xf32>
    %133 = arith.addf %128, %132 : vector<32x512xf32>
    %cst_54 = arith.constant 0.797884583 : f32
    %134 = vector.broadcast %cst_54 : f32 to vector<32x512xf32>
    %135 = arith.mulf %134, %133 : vector<32x512xf32>
    %136 = math.tanh %135 : vector<32x512xf32>
    %cst_55 = arith.constant 1.000000e+00 : f32
    %137 = vector.broadcast %cst_55 : f32 to vector<32x512xf32>
    %138 = arith.addf %137, %136 : vector<32x512xf32>
    %cst_56 = arith.constant 5.000000e-01 : f32
    %139 = vector.broadcast %cst_56 : f32 to vector<32x512xf32>
    %140 = arith.mulf %139, %138 : vector<32x512xf32>
    %141 = arith.mulf %128, %140 : vector<32x512xf32>
    %142 = arith.truncf %141 : vector<32x512xf32> to vector<32x512xbf16>
    %c0_57 = arith.constant 0 : index
    %c0_58 = arith.constant 0 : index
    %c0_59 = arith.constant 0 : index
    %143 = vector.load %arg13[%c0_57, %c0_58, %c0_59] : memref<1x512x128xbf16, #tpu.memory_space<vmem>>, vector<1x512x128xbf16>
    %144 = vector.shape_cast %143 : vector<1x512x128xbf16> to vector<512x128xbf16>
    %cst_60 = arith.constant dense<0.000000e+00> : vector<32x128xf32>
    %145 = tpu.matmul %142, %144, %cst_60 {dimension_numbers = #tpu.dot_dimension_numbers<[1], [0], [0], [1], [0, 0, 1, 1], [], []>} : vector<32x512xbf16>, vector<512x128xbf16>, vector<32x128xf32> -> vector<32x128xf32>
    %c0_61 = arith.constant 0 : index
    %c0_62 = arith.constant 0 : index
    %c0_63 = arith.constant 0 : index
    %146 = vector.load %arg14[%c0_61, %c0_62, %c0_63] : memref<1x1x128xf32, #tpu.memory_space<vmem>>, vector<1x1x128xf32>
    %147 = vector.shape_cast %146 : vector<1x1x128xf32> to vector<1x128xf32>
    %148 = vector.broadcast %147 : vector<1x128xf32> to vector<32x128xf32>
    %149 = arith.addf %145, %148 : vector<32x128xf32>
    %150 = arith.addf %94, %149 : vector<32x128xf32>
    %151 = vector.shape_cast %150 : vector<32x128xf32> to vector<2x16x128xf32>
    %c0_64 = arith.constant 0 : index
    %c0_65 = arith.constant 0 : index
    %c0_66 = arith.constant 0 : index
    %152 = vector.load %arg16[%c0_64, %c0_65, %c0_66] : memref<2x16x128xf32, #tpu.memory_space<vmem>>, vector<2x16x128xf32>
    tpu.vector_store %arg16[%c0_64, %c0_65, %c0_66], %151 {strides = array<i32>} : memref<2x16x128xf32, #tpu.memory_space<vmem>>, vector<2x16x128xf32>,
    %c1_i32 = arith.constant 1 : i32
    %153 = arith.cmpi eq, %arg1, %c1_i32 : i32
    %154 = arith.extui %153 : i1 to i32
    %c0_i32_67 = arith.constant 0 : i32
    %155 = arith.cmpi ne, %154, %c0_i32_67 : i32
    scf.if %155 {
      %156 = vector.shape_cast %150 : vector<32x128xf32> to vector<2x16x128xf32>
      %c0_68 = arith.constant 0 : index
      %c0_69 = arith.constant 0 : index
      %c0_70 = arith.constant 0 : index
      %157 = vector.load %arg15[%c0_68, %c0_69, %c0_70] : memref<2x16x128xf32, #tpu.memory_space<vmem>>, vector<2x16x128xf32>
      tpu.vector_store %arg15[%c0_68, %c0_69, %c0_70], %156 {strides = array<i32>} : memref<2x16x128xf32, #tpu.memory_space<vmem>>, vector<2x16x128xf32>,
    } else {
    }
    return
  }
  func.func @transform_0(%arg0: i32, %arg1: i32) -> (i32, i32, i32) {
    %c0_i32 = arith.constant 0 : i32
    %c0_i32_0 = arith.constant 0 : i32
    %c0_i32_1 = arith.constant 0 : i32
    return %arg0, %c0_i32, %c0_i32_0 : i32, i32, i32
  }
  func.func @transform_1(%arg0: i32, %arg1: i32) -> (i32, i32, i32) {
    %c0_i32 = arith.constant 0 : i32
    %c0_i32_0 = arith.constant 0 : i32
    %c0_i32_1 = arith.constant 0 : i32
    return %arg1, %c0_i32, %c0_i32_0 : i32, i32, i32
  }
  func.func @transform_2(%arg0: i32, %arg1: i32) -> (i32, i32, i32) {
    %c0_i32 = arith.constant 0 : i32
    %c0_i32_0 = arith.constant 0 : i32
    %c0_i32_1 = arith.constant 0 : i32
    return %arg1, %c0_i32, %c0_i32_0 : i32, i32, i32
  }
  func.func @transform_3(%arg0: i32, %arg1: i32) -> (i32, i32, i32) {
    %c0_i32 = arith.constant 0 : i32
    %c0_i32_0 = arith.constant 0 : i32
    %c0_i32_1 = arith.constant 0 : i32
    return %arg1, %c0_i32, %c0_i32_0 : i32, i32, i32
  }
  func.func @transform_4(%arg0: i32, %arg1: i32) -> (i32, i32, i32) {
    %c0_i32 = arith.constant 0 : i32
    %c0_i32_0 = arith.constant 0 : i32
    %c0_i32_1 = arith.constant 0 : i32
    return %arg1, %c0_i32, %c0_i32_0 : i32, i32, i32
  }
  func.func @transform_5(%arg0: i32, %arg1: i32) -> (i32, i32, i32) {
    %c0_i32 = arith.constant 0 : i32
    %c0_i32_0 = arith.constant 0 : i32
    %c0_i32_1 = arith.constant 0 : i32
    return %arg1, %c0_i32, %c0_i32_0 : i32, i32, i32
  }
  func.func @transform_6(%arg0: i32, %arg1: i32) -> (i32, i32, i32) {
    %c0_i32 = arith.constant 0 : i32
    %c0_i32_0 = arith.constant 0 : i32
    %c0_i32_1 = arith.constant 0 : i32
    return %arg1, %c0_i32, %c0_i32_0 : i32, i32, i32
  }
  func.func @transform_7(%arg0: i32, %arg1: i32) -> (i32, i32, i32) {
    %c0_i32 = arith.constant 0 : i32
    %c0_i32_0 = arith.constant 0 : i32
    %c0_i32_1 = arith.constant 0 : i32
    return %arg1, %c0_i32, %c0_i32_0 : i32, i32, i32
  }
  func.func @transform_8(%arg0: i32, %arg1: i32) -> (i32, i32, i32) {
    %c0_i32 = arith.constant 0 : i32
    %c0_i32_0 = arith.constant 0 : i32
    %c0_i32_1 = arith.constant 0 : i32
    return %arg1, %c0_i32, %c0_i32_0 : i32, i32, i32
  }
  func.func @transform_9(%arg0: i32, %arg1: i32) -> (i32, i32, i32) {
    %c0_i32 = arith.constant 0 : i32
    %c0_i32_0 = arith.constant 0 : i32
    %c0_i32_1 = arith.constant 0 : i32
    return %arg1, %c0_i32, %c0_i32_0 : i32, i32, i32
  }
  func.func @transform_10(%arg0: i32, %arg1: i32) -> (i32, i32, i32) {
    %c0_i32 = arith.constant 0 : i32
    %c0_i32_0 = arith.constant 0 : i32
    %c0_i32_1 = arith.constant 0 : i32
    return %arg1, %c0_i32, %c0_i32_0 : i32, i32, i32
  }
  func.func @transform_11(%arg0: i32, %arg1: i32) -> (i32, i32, i32) {
    %c0_i32 = arith.constant 0 : i32
    %c0_i32_0 = arith.constant 0 : i32
    %c0_i32_1 = arith.constant 0 : i32
    return %arg1, %c0_i32, %c0_i32_0 : i32, i32, i32
  }
  func.func @transform_12(%arg0: i32, %arg1: i32) -> (i32, i32, i32) {
    %c0_i32 = arith.constant 0 : i32
    %c0_i32_0 = arith.constant 0 : i32
    %c0_i32_1 = arith.constant 0 : i32
    return %arg1, %c0_i32, %c0_i32_0 : i32, i32, i32
  }
  func.func @transform_13(%arg0: i32, %arg1: i32) -> (i32, i32, i32) {
    %c0_i32 = arith.constant 0 : i32
    %c0_i32_0 = arith.constant 0 : i32
    %c0_i32_1 = arith.constant 0 : i32
    return %arg0, %c0_i32, %c0_i32_0 : i32, i32, i32
  }
}

</mosaic_0001>

<llo_original>
// kernel: tpu_custom_call.1
$region0: #{tpu_custom_call.1}
  #allocation0 [shape = 'u32[]', space=smem, size = 0x4, offset = 0x4, fixed_abs, tag = 'smem constant byte address 0x4 - core index']
  #allocation1 [shape = 'u32[144,128]{1,0:T(1,128)}', space=vmem, size = 0x12000, scoped, tag = 'internal scratch']
  #allocation2 [shape = 'f32[2,16,128]{2,1,0:T(8,128)}', space=vmem, size = 0x4000, scoped, tag = 'scratch operand']
  %s0 = inlined_call_operand.hbm [shape: f32[4,16,128], index: 0, kind: input, shape index: {}]
  %s1 = inlined_call_operand.hbm [shape: f32[2,1,128], index: 1, kind: input, shape index: {}]
  %s2 = inlined_call_operand.hbm [shape: f32[2,1,128], index: 2, kind: input, shape index: {}]
  %s3 = inlined_call_operand.hbm [shape: bf16[2,128,384], index: 3, kind: input, shape index: {}]
  %s4 = inlined_call_operand.vmem [shape: f32[2,1,384], index: 4, kind: input, shape index: {}]
  %s5 = inlined_call_operand.hbm [shape: bf16[2,128,128], index: 5, kind: input, shape index: {}]
  %s6 = inlined_call_operand.vmem [shape: f32[2,1,128], index: 6, kind: input, shape index: {}]
  %s7 = inlined_call_operand.hbm [shape: f32[2,1,128], index: 7, kind: input, shape index: {}]
  %s8 = inlined_call_operand.hbm [shape: f32[2,1,128], index: 8, kind: input, shape index: {}]
  %s9 = inlined_call_operand.hbm [shape: bf16[2,128,512], index: 9, kind: input, shape index: {}]
  %s10 = inlined_call_operand.vmem [shape: f32[2,1,512], index: 10, kind: input, shape index: {}]
  %s11 = inlined_call_operand.hbm [shape: bf16[2,512,128], index: 11, kind: input, shape index: {}]
  %s12 = inlined_call_operand.vmem [shape: f32[2,1,128], index: 12, kind: input, shape index: {}]
  %s13 = inlined_call_operand.hbm [shape: f32[4,16,128], index: 13, kind: output, shape index: {}]
  %s14 = sld [smem:[#allocation0]]
  $region129: #{tpu_custom_call.1} parent=0
    _
  %s16 = ssub.s32 1, %s14
  %s17 = scalar_select 0, %s16, %s14
  $region1: #{tpu_custom_call.1} parent=0
    #allocation3 [shape = 'u8[32768]{0}', space=vmem, size = 0x8000, scoped, tag = 'input window, operand 0']
    #allocation4 [shape = 's32[2]{0}', space=sflag, size = 0x8, scoped, tag = 'scoped memory for tpu_custom_call.1']
    #allocation5 [shape = 's32[2]{0}', space=sflag, size = 0x8, scoped, tag = 'scoped memory for tpu_custom_call.1']
    #allocation6 [shape = 'u8[1024]{0}', space=vmem, size = 0x400, scoped, tag = 'input window, operand 1']
    #allocation7 [shape = 's32[2]{0}', space=sflag, size = 0x8, scoped, tag = 'scoped memory for tpu_custom_call.1']
    #allocation8 [shape = 'u8[1024]{0}', space=vmem, size = 0x400, scoped, tag = 'input window, operand 2']
    #allocation9 [shape = 'u8[196608]{0}', space=vmem, size = 0x30000, scoped, tag = 'input window, operand 3']
    #allocation10 [shape = 's32[2]{0}', space=sflag, size = 0x8, scoped, tag = 'scoped memory for tpu_custom_call.1']
    #allocation11 [shape = 'u8[65536]{0}', space=vmem, size = 0x10000, scoped, tag = 'input window, operand 5']
    #allocation12 [shape = 'u8[1024]{0}', space=vmem, size = 0x400, scoped, tag = 'input window, operand 7']
    #allocation13 [shape = 's32[2]{0}', space=sflag, size = 0x8, scoped, tag = 'scoped memory for tpu_custom_call.1']
    #allocation14 [shape = 'u8[1024]{0}', space=vmem, size = 0x400, scoped, tag = 'input window, operand 8']
    #allocation15 [shape = 'u8[262144]{0}', space=vmem, size = 0x40000, scoped, tag = 'input window, operand 9']
    #allocation16 [shape = 's32[2]{0}', space=sflag, size = 0x8, scoped, tag = 'scoped memory for tpu_custom_call.1']
    #allocation17 [shape = 'u8[262144]{0}', space=vmem, size = 0x40000, scoped, tag = 'input window, operand 11']
    #allocation18 [shape = 'u8[32768]{0}', space=vmem, size = 0x8000, scoped, tag = 'output window, operand 0']
    %18 = vsyncpa [#allocation4], 0
    %s19 = scalar_lea.sflag [#allocation4], 1
    %20 = vsyncpa %s19, 0
    %21 = vsyncpa [#allocation7], 0
    %s22 = scalar_lea.sflag [#allocation7], 1
    %23 = vsyncpa %s22, 0
    %24 = vsyncpa [#allocation10], 0
    %s25 = scalar_lea.sflag [#allocation10], 1
    %26 = vsyncpa %s25, 0
    %27 = vsyncpa [#allocation13], 0
    %s28 = scalar_lea.sflag [#allocation13], 1
    %29 = vsyncpa %s28, 0
    %30 = vsyncpa [#allocation16], 0
    %s31 = scalar_lea.sflag [#allocation16], 1
    %32 = vsyncpa %s31, 0
    %33 = vsyncpa [#allocation5], 0
    %s34 = scalar_lea.sflag [#allocation5], 1
    %35 = vsyncpa %s34, 0
    loop: start=0, step=1, limit=6
    $region2: #{tpu_custom_call.1} parent=1 // loop_pre_header
      _
    $region3: #{tpu_custom_call.1} parent=1 // loop_header
      %s37 = sphi 0, %s41
      %p38 = scmp.ge.s32.totalorder %s37, 6
      %s44 = sphi 0, %s56
      %s45 = sphi 0, %s52
      %s46 = sphi 0, %s44
      %s47 = sphi 0, %s45
      %s48 = sphi 0, %s46
      %s49 = sphi 0, %s47
      %s59 = sphi 0, %s61
      %s62 = sphi 0, %s59
      %s63 = sphi 0, %s62
      %s79 = sphi 0, %s63
      %s85 = sphi 0, %s87
      %s88 = sphi 0, %s85
      %s89 = sphi 0, %s88
      %s105 = sphi 0, %s89
      %s111 = sphi 0, %s113
      %s114 = sphi 0, %s111
      %s115 = sphi 0, %s114
      %s131 = sphi 0, %s115
      %s137 = sphi 0, %s139
      %s140 = sphi 0, %s137
      %s141 = sphi 0, %s140
      %s157 = sphi 0, %s141
      %s163 = sphi 0, %s165
      %s166 = sphi 0, %s163
      %s167 = sphi 0, %s166
      %s183 = sphi 0, %s167
      %s189 = sphi 0, %s191
      %s192 = sphi 0, %s189
      %s193 = sphi 0, %s192
      %s209 = sphi 0, %s193
      %s215 = sphi 0, %s217
      %s218 = sphi 0, %s215
      %s219 = sphi 0, %s218
      %s235 = sphi 0, %s219
      %s241 = sphi 0, %s243
      %s244 = sphi 0, %s241
      %s245 = sphi 0, %s244
      %s261 = sphi 0, %s245
      %s267 = sphi 0, %s269
      %s270 = sphi 0, %s267
      %s271 = sphi 0, %s270
      %s287 = sphi 0, %s271
      %s293 = sphi 0, %s295
      %s296 = sphi 0, %s293
      %s297 = sphi 0, %s296
      %s313 = sphi 0, %s297
      %s319 = sphi 0, %s321
      %s322 = sphi 0, %s319
      %s323 = sphi 0, %s322
      %s339 = sphi 0, %s323
      %s345 = sphi 0, %s347
      %s348 = sphi 0, %s345
      %s349 = sphi 0, %s348
      %s365 = sphi 0, %s349
      %s371 = sphi 0, %s373
      %s374 = sphi 0, %s371
      %s375 = sphi 0, %s374
      %s391 = sphi 0, %s375
      %s397 = sphi 0, %s399
      %s400 = sphi 0, %s397
      %s401 = sphi 0, %s400
      %s417 = sphi 0, %s401
    $region4: #{tpu_custom_call.1} parent=1 // loop_header_branch
      %40 = sbr.rel (%p38) target = $region8
    $region5: #{tpu_custom_call.1} parent=1 // loop_body
      %s42 = ssub.s32 %s37, 1
      %s43 = ssub.s32 %s37, 2
      %s50 = sadd.s32 1, %s45
      %p51 = scmp.ge.s32.totalorder %s50, 2
      %s52 = scalar_select %p51, 0, %s50
      %s53 = sadd.s32 1, %s44
      %s54 = scalar_select %p51, %s53, %s44
      %p55 = scmp.ge.s32.totalorder %s54, 2
      %s56 = scalar_select %p55, 0, %s54
      %s57 = ssub.s32 %s44, %s56
      %p58 = scmp.eq.s32.totalorder %s57, 0
      %s60 = sadd.s32 %s59, 1
      %s61 = scalar_select %p58, %s59, %s60
      %p64 = pneg %p58
      %p65 = scmp.eq.s32.totalorder %s37, 3
      %p66 = por %p64, %p65
      %p67 = scmp.ne.s32.totalorder %s59, %s62
      %p68 = scmp.eq.s32.totalorder %s37, 0
      %p69 = por %p67, %p68
      %p70 = scmp.ne.s32.totalorder %s59, %s62
      %p71 = scmp.eq.s32.totalorder %s42, 3
      %p72 = por %p70, %p71
      %p73 = scmp.ne.s32.totalorder %s62, %s63
      %p74 = scmp.eq.s32.totalorder %s42, 0
      %p75 = por %p73, %p74
      %p76 = scmp.ne.s32.totalorder %s62, %s63
      %p77 = scmp.eq.s32.totalorder %s43, 3
      %p78 = por %p76, %p77
      %p80 = scmp.ne.s32.totalorder %s63, %s79
      %p81 = scmp.eq.s32.totalorder %s43, 0
      %p82 = por %p80, %p81
      %s83 = ssub.s32 %s45, %s52
      %p84 = scmp.eq.s32.totalorder %s83, 0
      %s86 = sadd.s32 %s85, 1
      %s87 = scalar_select %p84, %s85, %s86
      %p90 = pneg %p84
      %p91 = scmp.eq.s32.totalorder %s37, 3
      %p92 = por %p90, %p91
      %p93 = scmp.ne.s32.totalorder %s85, %s88
      %p94 = scmp.eq.s32.totalorder %s37, 0
      %p95 = por %p93, %p94
      %p96 = scmp.ne.s32.totalorder %s85, %s88
      %p97 = scmp.eq.s32.totalorder %s42, 3
      %p98 = por %p96, %p97
      %p99 = scmp.ne.s32.totalorder %s88, %s89
      %p100 = scmp.eq.s32.totalorder %s42, 0
      %p101 = por %p99, %p100
      %p102 = scmp.ne.s32.totalorder %s88, %s89
      %p103 = scmp.eq.s32.totalorder %s43, 3
      %p104 = por %p102, %p103
      %p106 = scmp.ne.s32.totalorder %s89, %s105
      %p107 = scmp.eq.s32.totalorder %s43, 0
      %p108 = por %p106, %p107
      %s109 = ssub.s32 %s45, %s52
      %p110 = scmp.eq.s32.totalorder %s109, 0
      %s112 = sadd.s32 %s111, 1
      %s113 = scalar_select %p110, %s111, %s112
      %p116 = pneg %p110
      %p117 = scmp.eq.s32.totalorder %s37, 3
      %p118 = por %p116, %p117
      %p119 = scmp.ne.s32.totalorder %s111, %s114
      %p120 = scmp.eq.s32.totalorder %s37, 0
      %p121 = por %p119, %p120
      %p122 = scmp.ne.s32.totalorder %s111, %s114
      %p123 = scmp.eq.s32.totalorder %s42, 3
      %p124 = por %p122, %p123
      %p125 = scmp.ne.s32.totalorder %s114, %s115
      %p126 = scmp.eq.s32.totalorder %s42, 0
      %p127 = por %p125, %p126
      %p128 = scmp.ne.s32.totalorder %s114, %s115
      %p129 = scmp.eq.s32.totalorder %s43, 3
      %p130 = por %p128, %p129
      %p132 = scmp.ne.s32.totalorder %s115, %s131
      %p133 = scmp.eq.s32.totalorder %s43, 0
      %p134 = por %p132, %p133
      %s135 = ssub.s32 %s45, %s52
      %p136 = scmp.eq.s32.totalorder %s135, 0
      %s138 = sadd.s32 %s137, 1
      %s139 = scalar_select %p136, %s137, %s138
      %p142 = pneg %p136
      %p143 = scmp.eq.s32.totalorder %s37, 3
      %p144 = por %p142, %p143
      %p145 = scmp.ne.s32.totalorder %s137, %s140
      %p146 = scmp.eq.s32.totalorder %s37, 0
      %p147 = por %p145, %p146
      %p148 = scmp.ne.s32.totalorder %s137, %s140
      %p149 = scmp.eq.s32.totalorder %s42, 3
      %p150 = por %p148, %p149
      %p151 = scmp.ne.s32.totalorder %s140, %s141
      %p152 = scmp.eq.s32.totalorder %s42, 0
      %p153 = por %p151, %p152
      %p154 = scmp.ne.s32.totalorder %s140, %s141
      %p155 = scmp.eq.s32.totalorder %s43, 3
      %p156 = por %p154, %p155
      %p158 = scmp.ne.s32.totalorder %s141, %s157
      %p159 = scmp.eq.s32.totalorder %s43, 0
      %p160 = por %p158, %p159
      %s161 = ssub.s32 %s45, %s52
      %p162 = scmp.eq.s32.totalorder %s161, 0
      %s164 = sadd.s32 %s163, 1
      %s165 = scalar_select %p162, %s163, %s164
      %p168 = pneg %p162
      %p169 = scmp.eq.s32.totalorder %s37, 3
      %p170 = por %p168, %p169
      %p171 = scmp.ne.s32.totalorder %s163, %s166
      %p172 = scmp.eq.s32.totalorder %s37, 0
      %p173 = por %p171, %p172
      %p174 = scmp.ne.s32.totalorder %s163, %s166
      %p175 = scmp.eq.s32.totalorder %s42, 3
      %p176 = por %p174, %p175
      %p177 = scmp.ne.s32.totalorder %s166, %s167
      %p178 = scmp.eq.s32.totalorder %s42, 0
      %p179 = por %p177, %p178
      %p180 = scmp.ne.s32.totalorder %s166, %s167
      %p181 = scmp.eq.s32.totalorder %s43, 3
      %p182 = por %p180, %p181
      %p184 = scmp.ne.s32.totalorder %s167, %s183
      %p185 = scmp.eq.s32.totalorder %s43, 0
      %p186 = por %p184, %p185
      %s187 = ssub.s32 %s45, %s52
      %p188 = scmp.eq.s32.totalorder %s187, 0
      %s190 = sadd.s32 %s189, 1
      %s191 = scalar_select %p188, %s189, %s190
      %p194 = pneg %p188
      %p195 = scmp.eq.s32.totalorder %s37, 3
      %p196 = por %p194, %p195
      %p197 = scmp.ne.s32.totalorder %s189, %s192
      %p198 = scmp.eq.s32.totalorder %s37, 0
      %p199 = por %p197, %p198
      %p200 = scmp.ne.s32.totalorder %s189, %s192
      %p201 = scmp.eq.s32.totalorder %s42, 3
      %p202 = por %p200, %p201
      %p203 = scmp.ne.s32.totalorder %s192, %s193
      %p204 = scmp.eq.s32.totalorder %s42, 0
      %p205 = por %p203, %p204
      %p206 = scmp.ne.s32.totalorder %s192, %s193
      %p207 = scmp.eq.s32.totalorder %s43, 3
      %p208 = por %p206, %p207
      %p210 = scmp.ne.s32.totalorder %s193, %s209
      %p211 = scmp.eq.s32.totalorder %s43, 0
      %p212 = por %p210, %p211
      %s213 = ssub.s32 %s45, %s52
      %p214 = scmp.eq.s32.totalorder %s213, 0
      %s216 = sadd.s32 %s215, 1
      %s217 = scalar_select %p214, %s215, %s216
      %p220 = pneg %p214
      %p221 = scmp.eq.s32.totalorder %s37, 3
      %p222 = por %p220, %p221
      %p223 = scmp.ne.s32.totalorder %s215, %s218
      %p224 = scmp.eq.s32.totalorder %s37, 0
      %p225 = por %p223, %p224
      %p226 = scmp.ne.s32.totalorder %s215, %s218
      %p227 = scmp.eq.s32.totalorder %s42, 3
      %p228 = por %p226, %p227
      %p229 = scmp.ne.s32.totalorder %s218, %s219
      %p230 = scmp.eq.s32.totalorder %s42, 0
      %p231 = por %p229, %p230
      %p232 = scmp.ne.s32.totalorder %s218, %s219
      %p233 = scmp.eq.s32.totalorder %s43, 3
      %p234 = por %p232, %p233
      %p236 = scmp.ne.s32.totalorder %s219, %s235
      %p237 = scmp.eq.s32.totalorder %s43, 0
      %p238 = por %p236, %p237
      %s239 = ssub.s32 %s45, %s52
      %p240 = scmp.eq.s32.totalorder %s239, 0
      %s242 = sadd.s32 %s241, 1
      %s243 = scalar_select %p240, %s241, %s242
      %p246 = pneg %p240
      %p247 = scmp.eq.s32.totalorder %s37, 3
      %p248 = por %p246, %p247
      %p249 = scmp.ne.s32.totalorder %s241, %s244
      %p250 = scmp.eq.s32.totalorder %s37, 0
      %p251 = por %p249, %p250
      %p252 = scmp.ne.s32.totalorder %s241, %s244
      %p253 = scmp.eq.s32.totalorder %s42, 3
      %p254 = por %p252, %p253
      %p255 = scmp.ne.s32.totalorder %s244, %s245
      %p256 = scmp.eq.s32.totalorder %s42, 0
      %p257 = por %p255, %p256
      %p258 = scmp.ne.s32.totalorder %s244, %s245
      %p259 = scmp.eq.s32.totalorder %s43, 3
      %p260 = por %p258, %p259
      %p262 = scmp.ne.s32.totalorder %s245, %s261
      %p263 = scmp.eq.s32.totalorder %s43, 0
      %p264 = por %p262, %p263
      %s265 = ssub.s32 %s45, %s52
      %p266 = scmp.eq.s32.totalorder %s265, 0
      %s268 = sadd.s32 %s267, 1
      %s269 = scalar_select %p266, %s267, %s268
      %p272 = pneg %p266
      %p273 = scmp.eq.s32.totalorder %s37, 3
      %p274 = por %p272, %p273
      %p275 = scmp.ne.s32.totalorder %s267, %s270
      %p276 = scmp.eq.s32.totalorder %s37, 0
      %p277 = por %p275, %p276
      %p278 = scmp.ne.s32.totalorder %s267, %s270
      %p279 = scmp.eq.s32.totalorder %s42, 3
      %p280 = por %p278, %p279
      %p281 = scmp.ne.s32.totalorder %s270, %s271
      %p282 = scmp.eq.s32.totalorder %s42, 0
      %p283 = por %p281, %p282
      %p284 = scmp.ne.s32.totalorder %s270, %s271
      %p285 = scmp.eq.s32.totalorder %s43, 3
      %p286 = por %p284, %p285
      %p288 = scmp.ne.s32.totalorder %s271, %s287
      %p289 = scmp.eq.s32.totalorder %s43, 0
      %p290 = por %p288, %p289
      %s291 = ssub.s32 %s45, %s52
      %p292 = scmp.eq.s32.totalorder %s291, 0
      %s294 = sadd.s32 %s293, 1
      %s295 = scalar_select %p292, %s293, %s294
      %p298 = pneg %p292
      %p299 = scmp.eq.s32.totalorder %s37, 3
      %p300 = por %p298, %p299
      %p301 = scmp.ne.s32.totalorder %s293, %s296
      %p302 = scmp.eq.s32.totalorder %s37, 0
      %p303 = por %p301, %p302
      %p304 = scmp.ne.s32.totalorder %s293, %s296
      %p305 = scmp.eq.s32.totalorder %s42, 3
      %p306 = por %p304, %p305
      %p307 = scmp.ne.s32.totalorder %s296, %s297
      %p308 = scmp.eq.s32.totalorder %s42, 0
      %p309 = por %p307, %p308
      %p310 = scmp.ne.s32.totalorder %s296, %s297
      %p311 = scmp.eq.s32.totalorder %s43, 3
      %p312 = por %p310, %p311
      %p314 = scmp.ne.s32.totalorder %s297, %s313
      %p315 = scmp.eq.s32.totalorder %s43, 0
      %p316 = por %p314, %p315
      %s317 = ssub.s32 %s45, %s52
      %p318 = scmp.eq.s32.totalorder %s317, 0
      %s320 = sadd.s32 %s319, 1
      %s321 = scalar_select %p318, %s319, %s320
      %p324 = pneg %p318
      %p325 = scmp.eq.s32.totalorder %s37, 3
      %p326 = por %p324, %p325
      %p327 = scmp.ne.s32.totalorder %s319, %s322
      %p328 = scmp.eq.s32.totalorder %s37, 0
      %p329 = por %p327, %p328
      %p330 = scmp.ne.s32.totalorder %s319, %s322
      %p331 = scmp.eq.s32.totalorder %s42, 3
      %p332 = por %p330, %p331
      %p333 = scmp.ne.s32.totalorder %s322, %s323
      %p334 = scmp.eq.s32.totalorder %s42, 0
      %p335 = por %p333, %p334
      %p336 = scmp.ne.s32.totalorder %s322, %s323
      %p337 = scmp.eq.s32.totalorder %s43, 3
      %p338 = por %p336, %p337
      %p340 = scmp.ne.s32.totalorder %s323, %s339
      %p341 = scmp.eq.s32.totalorder %s43, 0
      %p342 = por %p340, %p341
      %s343 = ssub.s32 %s45, %s52
      %p344 = scmp.eq.s32.totalorder %s343, 0
      %s346 = sadd.s32 %s345, 1
      %s347 = scalar_select %p344, %s345, %s346
      %p350 = pneg %p344
      %p351 = scmp.eq.s32.totalorder %s37, 3
      %p352 = por %p350, %p351
      %p353 = scmp.ne.s32.totalorder %s345, %s348
      %p354 = scmp.eq.s32.totalorder %s37, 0
      %p355 = por %p353, %p354
      %p356 = scmp.ne.s32.totalorder %s345, %s348
      %p357 = scmp.eq.s32.totalorder %s42, 3
      %p358 = por %p356, %p357
      %p359 = scmp.ne.s32.totalorder %s348, %s349
      %p360 = scmp.eq.s32.totalorder %s42, 0
      %p361 = por %p359, %p360
      %p362 = scmp.ne.s32.totalorder %s348, %s349
      %p363 = scmp.eq.s32.totalorder %s43, 3
      %p364 = por %p362, %p363
      %p366 = scmp.ne.s32.totalorder %s349, %s365
      %p367 = scmp.eq.s32.totalorder %s43, 0
      %p368 = por %p366, %p367
      %s369 = ssub.s32 %s45, %s52
      %p370 = scmp.eq.s32.totalorder %s369, 0
      %s372 = sadd.s32 %s371, 1
      %s373 = scalar_select %p370, %s371, %s372
      %p376 = pneg %p370
      %p377 = scmp.eq.s32.totalorder %s37, 3
      %p378 = por %p376, %p377
      %p379 = scmp.ne.s32.totalorder %s371, %s374
      %p380 = scmp.eq.s32.totalorder %s37, 0
      %p381 = por %p379, %p380
      %p382 = scmp.ne.s32.totalorder %s371, %s374
      %p383 = scmp.eq.s32.totalorder %s42, 3
      %p384 = por %p382, %p383
      %p385 = scmp.ne.s32.totalorder %s374, %s375
      %p386 = scmp.eq.s32.totalorder %s42, 0
      %p387 = por %p385, %p386
      %p388 = scmp.ne.s32.totalorder %s374, %s375
      %p389 = scmp.eq.s32.totalorder %s43, 3
      %p390 = por %p388, %p389
      %p392 = scmp.ne.s32.totalorder %s375, %s391
      %p393 = scmp.eq.s32.totalorder %s43, 0
      %p394 = por %p392, %p393
      %s395 = ssub.s32 %s44, %s56
      %p396 = scmp.eq.s32.totalorder %s395, 0
      %s398 = sadd.s32 %s397, 1
      %s399 = scalar_select %p396, %s397, %s398
      %p402 = pneg %p396
      %p403 = scmp.eq.s32.totalorder %s37, 3
      %p404 = por %p402, %p403
      %p405 = scmp.ne.s32.totalorder %s397, %s400
      %p406 = scmp.eq.s32.totalorder %s37, 0
      %p407 = por %p405, %p406
      %p408 = scmp.ne.s32.totalorder %s397, %s400
      %p409 = scmp.eq.s32.totalorder %s42, 3
      %p410 = por %p408, %p409
      %p411 = scmp.ne.s32.totalorder %s400, %s401
      %p412 = scmp.eq.s32.totalorder %s42, 0
      %p413 = por %p411, %p412
      %p414 = scmp.ne.s32.totalorder %s400, %s401
      %p415 = scmp.eq.s32.totalorder %s43, 3
      %p416 = por %p414, %p415
      %p418 = scmp.ne.s32.totalorder %s401, %s417
      %p419 = scmp.eq.s32.totalorder %s43, 0
      %p420 = por %p418, %p419
      %p421 = scmp.le.s32.totalorder 1, %s37
      %p422 = scmp.lt.s32.totalorder %s37, 5
      %p423 = pnand %p421, %p422
      %p424 = pneg %p423
      // Predicated region
      $region9: #{tpu_custom_call.1} parent=5 // pred_check
        _
      $region10: #{tpu_custom_call.1} parent=5 // pred_check_branch
        %426 = sbr.rel (%p423) target = $region12
      $region11: #{tpu_custom_call.1} parent=5 // pred_region
        %s427 = ssub.s32 %s37, 1
      $region12: #{tpu_custom_call.1} parent=5 // pred_fallthru
        _
      %p428 = scmp.lt.s32.totalorder %s37, 4
      // Predicated region
      $region13: #{tpu_custom_call.1} parent=5 // pred_check
        %p429 = pneg %p428
      $region14: #{tpu_custom_call.1} parent=5 // pred_check_branch
        %431 = sbr.rel (%p429) target = $region16
      $region15: #{tpu_custom_call.1} parent=5 // pred_region
        // Predicated region
        $region17: #{tpu_custom_call.1} parent=15 // pred_check
          %p432 = pneg %p69
        $region18: #{tpu_custom_call.1} parent=15 // pred_check_branch
          %434 = sbr.rel (%p432) target = $region20
        $region19: #{tpu_custom_call.1} parent=15 // pred_region
          %s435 = sand.u32 %s59, 1
          %s436 = scalar_lea.sflag [#allocation4], %s435
          %s437 = sand.u32 %s59, 1
          %s438 = smul.addr %s437, 32
          %s439 = scalar_lea.vmem [#allocation3], %s438
          %s440 = smul.u32 2, %s44
          %s442 = ssub.s32 512, 512
          %443 = vsyncadd %s436, %s442
          %s444 = smul.addr %s440, 2
          %s445 = smul.addr %s444, 128
          %s446 = scalar_lea.hbm %s0, %s445
          %s447 = sshll.u32 %s439, 4
          %s448 = int_to_ptr.vmem [resolvable:$true] %s447
          %453 = dma.hbm_to_vmem [thread:$0]  %s446, 512, %s448, %s436, 128, 128, 8
        $region20: #{tpu_custom_call.1} parent=15 // pred_fallthru
          _
        // Predicated region
        $region21: #{tpu_custom_call.1} parent=15 // pred_check
          %p454 = pneg %p95
        $region22: #{tpu_custom_call.1} parent=15 // pred_check_branch
          %456 = sbr.rel (%p454) target = $region24
        $region23: #{tpu_custom_call.1} parent=15 // pred_region
          %s457 = sand.u32 %s37, 1
          %s458 = scalar_lea.sflag [#allocation7], %s457
          %s459 = sand.u32 %s85, 1
          %s460 = scalar_lea.vmem [#allocation6], %s459
          %s462 = ssub.s32 16, 16
          %463 = vsyncadd %s458, %s462
          %s464 = smul.addr %s45, 16
          %s465 = scalar_lea.hbm %s1, %s464
          %s467 = sshll.u32 %s460, 4
          %s468 = int_to_ptr.vmem [resolvable:$true] %s467
          %470 = dma.hbm_to_vmem [thread:$0]  %s465, 16, %s468, %s458
        $region24: #{tpu_custom_call.1} parent=15 // pred_fallthru
          _
        // Predicated region
        $region25: #{tpu_custom_call.1} parent=15 // pred_check
          %p471 = pneg %p121
        $region26: #{tpu_custom_call.1} parent=15 // pred_check_branch
          %473 = sbr.rel (%p471) target = $region28
        $region27: #{tpu_custom_call.1} parent=15 // pred_region
          %s474 = sand.u32 %s37, 1
          %s475 = scalar_lea.sflag [#allocation7], %s474
          %s476 = sand.u32 %s111, 1
          %s477 = scalar_lea.vmem [#allocation8], %s476
          %s479 = ssub.s32 16, 16
          %480 = vsyncadd %s475, %s479
          %s481 = smul.addr %s45, 16
          %s482 = scalar_lea.hbm %s2, %s481
          %s484 = sshll.u32 %s477, 4
          %s485 = int_to_ptr.vmem [resolvable:$true] %s484
          %487 = dma.hbm_to_vmem [thread:$0]  %s482, 16, %s485, %s475
        $region28: #{tpu_custom_call.1} parent=15 // pred_fallthru
          _
        // Predicated region
        $region29: #{tpu_custom_call.1} parent=15 // pred_check
          %p488 = pneg %p147
        $region30: #{tpu_custom_call.1} parent=15 // pred_check_branch
          %490 = sbr.rel (%p488) target = $region32
        $region31: #{tpu_custom_call.1} parent=15 // pred_region
          %s491 = sand.u32 %s37, 1
          %s492 = scalar_lea.sflag [#allocation10], %s491
          %s493 = sand.u32 %s137, 1
          %s494 = smul.addr %s493, 192
          %s495 = scalar_lea.vmem [#allocation9], %s494
          %s497 = ssub.s32 3072, 3072
          %498 = vsyncadd %s492, %s497
          %s499 = smul.addr %s45, 48
          %s500 = smul.addr %s499, 64
          %s501 = scalar_lea.hbm %s3, %s500
          %s502 = sshll.u32 %s495, 4
          %s503 = int_to_ptr.vmem [resolvable:$true] %s502
          %508 = dma.hbm_to_vmem [thread:$0]  %s501, 3072, %s503, %s492, 192, 192, 12
        $region32: #{tpu_custom_call.1} parent=15 // pred_fallthru
          _
        // Predicated region
        $region33: #{tpu_custom_call.1} parent=15 // pred_check
          %p509 = pneg %p173
        $region34: #{tpu_custom_call.1} parent=15 // pred_check_branch
          %511 = sbr.rel (%p509) target = $region36
        $region35: #{tpu_custom_call.1} parent=15 // pred_region
          %p512 = scmp.lt.s32.totalorder %s45, 1
          %s513 = scalar_select %p512, %s45, 1
          %s514 = smul.addr %s513, 3
          %s515 = scalar_lea.vmem %s4, %s514
        $region36: #{tpu_custom_call.1} parent=15 // pred_fallthru
          _
        // Predicated region
        $region37: #{tpu_custom_call.1} parent=15 // pred_check
          %p516 = pneg %p199
        $region38: #{tpu_custom_call.1} parent=15 // pred_check_branch
          %518 = sbr.rel (%p516) target = $region40
        $region39: #{tpu_custom_call.1} parent=15 // pred_region
          %s519 = sand.u32 %s37, 1
          %s520 = scalar_lea.sflag [#allocation10], %s519
          %s521 = sand.u32 %s189, 1
          %s522 = smul.addr %s521, 64
          %s523 = scalar_lea.vmem [#allocation11], %s522
          %s525 = ssub.s32 1024, 1024
          %526 = vsyncadd %s520, %s525
          %s527 = smul.addr %s45, 16
          %s528 = smul.addr %s527, 64
          %s529 = scalar_lea.hbm %s5, %s528
          %s530 = sshll.u32 %s523, 4
          %s531 = int_to_ptr.vmem [resolvable:$true] %s530
          %536 = dma.hbm_to_vmem [thread:$0]  %s529, 1024, %s531, %s520, 64, 64, 4
        $region40: #{tpu_custom_call.1} parent=15 // pred_fallthru
          _
        // Predicated region
        $region41: #{tpu_custom_call.1} parent=15 // pred_check
          %p537 = pneg %p225
        $region42: #{tpu_custom_call.1} parent=15 // pred_check_branch
          %539 = sbr.rel (%p537) target = $region44
        $region43: #{tpu_custom_call.1} parent=15 // pred_region
          %p540 = scmp.lt.s32.totalorder %s45, 1
          %s541 = scalar_select %p540, %s45, 1
          %s542 = scalar_lea.vmem %s6, %s541
        $region44: #{tpu_custom_call.1} parent=15 // pred_fallthru
          _
        // Predicated region
        $region45: #{tpu_custom_call.1} parent=15 // pred_check
          %p543 = pneg %p251
        $region46: #{tpu_custom_call.1} parent=15 // pred_check_branch
          %545 = sbr.rel (%p543) target = $region48
        $region47: #{tpu_custom_call.1} parent=15 // pred_region
          %s546 = sand.u32 %s37, 1
          %s547 = scalar_lea.sflag [#allocation13], %s546
          %s548 = sand.u32 %s241, 1
          %s549 = scalar_lea.vmem [#allocation12], %s548
          %s551 = ssub.s32 16, 16
          %552 = vsyncadd %s547, %s551
          %s553 = smul.addr %s45, 16
          %s554 = scalar_lea.hbm %s7, %s553
          %s556 = sshll.u32 %s549, 4
          %s557 = int_to_ptr.vmem [resolvable:$true] %s556
          %559 = dma.hbm_to_vmem [thread:$0]  %s554, 16, %s557, %s547
        $region48: #{tpu_custom_call.1} parent=15 // pred_fallthru
          _
        // Predicated region
        $region49: #{tpu_custom_call.1} parent=15 // pred_check
          %p560 = pneg %p277
        $region50: #{tpu_custom_call.1} parent=15 // pred_check_branch
          %562 = sbr.rel (%p560) target = $region52
        $region51: #{tpu_custom_call.1} parent=15 // pred_region
          %s563 = sand.u32 %s37, 1
          %s564 = scalar_lea.sflag [#allocation13], %s563
          %s565 = sand.u32 %s267, 1
          %s566 = scalar_lea.vmem [#allocation14], %s565
          %s568 = ssub.s32 16, 16
          %569 = vsyncadd %s564, %s568
          %s570 = smul.addr %s45, 16
          %s571 = scalar_lea.hbm %s8, %s570
          %s573 = sshll.u32 %s566, 4
          %s574 = int_to_ptr.vmem [resolvable:$true] %s573
          %576 = dma.hbm_to_vmem [thread:$0]  %s571, 16, %s574, %s564
        $region52: #{tpu_custom_call.1} parent=15 // pred_fallthru
          _
        // Predicated region
        $region53: #{tpu_custom_call.1} parent=15 // pred_check
          %p577 = pneg %p303
        $region54: #{tpu_custom_call.1} parent=15 // pred_check_branch
          %579 = sbr.rel (%p577) target = $region56
        $region55: #{tpu_custom_call.1} parent=15 // pred_region
          %s580 = sand.u32 %s37, 1
          %s581 = scalar_lea.sflag [#allocation16], %s580
          %s582 = sand.u32 %s293, 1
          %s583 = smul.addr %s582, 256
          %s584 = scalar_lea.vmem [#allocation15], %s583
          %s586 = ssub.s32 4096, 4096
          %587 = vsyncadd %s581, %s586
          %s588 = smul.addr %s45, 64
          %s589 = smul.addr %s588, 64
          %s590 = scalar_lea.hbm %s9, %s589
          %s591 = sshll.u32 %s584, 4
          %s592 = int_to_ptr.vmem [resolvable:$true] %s591
          %597 = dma.hbm_to_vmem [thread:$0]  %s590, 4096, %s592, %s581, 256, 256, 16
        $region56: #{tpu_custom_call.1} parent=15 // pred_fallthru
          _
        // Predicated region
        $region57: #{tpu_custom_call.1} parent=15 // pred_check
          %p598 = pneg %p329
        $region58: #{tpu_custom_call.1} parent=15 // pred_check_branch
          %600 = sbr.rel (%p598) target = $region60
        $region59: #{tpu_custom_call.1} parent=15 // pred_region
          %p601 = scmp.lt.s32.totalorder %s45, 1
          %s602 = scalar_select %p601, %s45, 1
          %s603 = smul.addr %s602, 4
          %s604 = scalar_lea.vmem %s10, %s603
        $region60: #{tpu_custom_call.1} parent=15 // pred_fallthru
          _
        // Predicated region
        $region61: #{tpu_custom_call.1} parent=15 // pred_check
          %p605 = pneg %p355
        $region62: #{tpu_custom_call.1} parent=15 // pred_check_branch
          %607 = sbr.rel (%p605) target = $region64
        $region63: #{tpu_custom_call.1} parent=15 // pred_region
          %s608 = sand.u32 %s37, 1
          %s609 = scalar_lea.sflag [#allocation16], %s608
          %s610 = sand.u32 %s345, 1
          %s611 = smul.addr %s610, 256
          %s612 = scalar_lea.vmem [#allocation17], %s611
          %s614 = ssub.s32 4096, 4096
          %615 = vsyncadd %s609, %s614
          %s616 = smul.addr %s45, 64
          %s617 = smul.addr %s616, 64
          %s618 = scalar_lea.hbm %s11, %s617
          %s619 = sshll.u32 %s612, 4
          %s620 = int_to_ptr.vmem [resolvable:$true] %s619
          %625 = dma.hbm_to_vmem [thread:$0]  %s618, 4096, %s620, %s609, 64, 64, 4
        $region64: #{tpu_custom_call.1} parent=15 // pred_fallthru
          _
        // Predicated region
        $region65: #{tpu_custom_call.1} parent=15 // pred_check
          %p626 = pneg %p381
        $region66: #{tpu_custom_call.1} parent=15 // pred_check_branch
          %628 = sbr.rel (%p626) target = $region68
        $region67: #{tpu_custom_call.1} parent=15 // pred_region
          %p629 = scmp.lt.s32.totalorder %s45, 1
          %s630 = scalar_select %p629, %s45, 1
          %s631 = scalar_lea.vmem %s12, %s630
        $region68: #{tpu_custom_call.1} parent=15 // pred_fallthru
          _
      $region16: #{tpu_custom_call.1} parent=5 // pred_fallthru
        _
      %p632 = scmp.le.s32.totalorder 1, %s37
      %p633 = scmp.lt.s32.totalorder %s37, 5
      %p634 = pnand %p632, %p633
      %p635 = pneg %p634
      // Predicated region
      $region69: #{tpu_custom_call.1} parent=5 // pred_check
        _
      $region70: #{tpu_custom_call.1} parent=5 // pred_check_branch
        %637 = sbr.rel (%p634) target = $region72
      $region71: #{tpu_custom_call.1} parent=5 // pred_region
        %s638 = ssub.s32 %s37, 1
        %s639 = sand.u32 %s62, 1
        %s640 = scalar_lea.sflag [#allocation4], %s639
        %s641 = sand.u32 %s62, 1
        %s642 = smul.addr %s641, 32
        %s643 = scalar_lea.vmem [#allocation3], %s642
        // Predicated region
        $region73: #{tpu_custom_call.1} parent=71 // pred_check
          %p644 = pneg %p75
        $region74: #{tpu_custom_call.1} parent=71 // pred_check_branch
          %646 = sbr.rel (%p644) target = $region76
        $region75: #{tpu_custom_call.1} parent=71 // pred_region
          %647 = dma.done %s640, 512
        $region76: #{tpu_custom_call.1} parent=71 // pred_fallthru
          _
        %s648 = sand.u32 %s42, 1
        %s649 = scalar_lea.sflag [#allocation7], %s648
        %s650 = sand.u32 %s88, 1
        %s651 = scalar_lea.vmem [#allocation6], %s650
        // Predicated region
        $region77: #{tpu_custom_call.1} parent=71 // pred_check
          %p652 = pneg %p101
        $region78: #{tpu_custom_call.1} parent=71 // pred_check_branch
          %654 = sbr.rel (%p652) target = $region80
        $region79: #{tpu_custom_call.1} parent=71 // pred_region
          %655 = dma.done %s649, 16
        $region80: #{tpu_custom_call.1} parent=71 // pred_fallthru
          _
        %s656 = sand.u32 %s42, 1
        %s657 = scalar_lea.sflag [#allocation7], %s656
        %s658 = sand.u32 %s114, 1
        %s659 = scalar_lea.vmem [#allocation8], %s658
        // Predicated region
        $region81: #{tpu_custom_call.1} parent=71 // pred_check
          %p660 = pneg %p127
        $region82: #{tpu_custom_call.1} parent=71 // pred_check_branch
          %662 = sbr.rel (%p660) target = $region84
        $region83: #{tpu_custom_call.1} parent=71 // pred_region
          %663 = dma.done %s657, 16
        $region84: #{tpu_custom_call.1} parent=71 // pred_fallthru
          _
        %s664 = sand.u32 %s42, 1
        %s665 = scalar_lea.sflag [#allocation10], %s664
        %s666 = sand.u32 %s140, 1
        %s667 = smul.addr %s666, 192
        %s668 = scalar_lea.vmem [#allocation9], %s667
        // Predicated region
        $region85: #{tpu_custom_call.1} parent=71 // pred_check
          %p669 = pneg %p153
        $region86: #{tpu_custom_call.1} parent=71 // pred_check_branch
          %671 = sbr.rel (%p669) target = $region88
        $region87: #{tpu_custom_call.1} parent=71 // pred_region
          %672 = dma.done %s665, 3072
        $region88: #{tpu_custom_call.1} parent=71 // pred_fallthru
          _
        %s673 = sand.u32 %s42, 1
        %s674 = scalar_lea.sflag [#allocation10], %s673
        %s675 = sand.u32 %s192, 1
        %s676 = smul.addr %s675, 64
        %s677 = scalar_lea.vmem [#allocation11], %s676
        // Predicated region
        $region89: #{tpu_custom_call.1} parent=71 // pred_check
          %p678 = pneg %p205
        $region90: #{tpu_custom_call.1} parent=71 // pred_check_branch
          %680 = sbr.rel (%p678) target = $region92
        $region91: #{tpu_custom_call.1} parent=71 // pred_region
          %681 = dma.done %s674, 1024
        $region92: #{tpu_custom_call.1} parent=71 // pred_fallthru
          _
        %s682 = sand.u32 %s42, 1
        %s683 = scalar_lea.sflag [#allocation13], %s682
        %s684 = sand.u32 %s244, 1
        %s685 = scalar_lea.vmem [#allocation12], %s684
        // Predicated region
        $region93: #{tpu_custom_call.1} parent=71 // pred_check
          %p686 = pneg %p257
        $region94: #{tpu_custom_call.1} parent=71 // pred_check_branch
          %688 = sbr.rel (%p686) target = $region96
        $region95: #{tpu_custom_call.1} parent=71 // pred_region
          %689 = dma.done %s683, 16
        $region96: #{tpu_custom_call.1} parent=71 // pred_fallthru
          _
        %s690 = sand.u32 %s42, 1
        %s691 = scalar_lea.sflag [#allocation13], %s690
        %s692 = sand.u32 %s270, 1
        %s693 = scalar_lea.vmem [#allocation14], %s692
        // Predicated region
        $region97: #{tpu_custom_call.1} parent=71 // pred_check
          %p694 = pneg %p283
        $region98: #{tpu_custom_call.1} parent=71 // pred_check_branch
          %696 = sbr.rel (%p694) target = $region100
        $region99: #{tpu_custom_call.1} parent=71 // pred_region
          %697 = dma.done %s691, 16
        $region100: #{tpu_custom_call.1} parent=71 // pred_fallthru
          _
        %s698 = sand.u32 %s42, 1
        %s699 = scalar_lea.sflag [#allocation16], %s698
        %s700 = sand.u32 %s296, 1
        %s701 = smul.addr %s700, 256
        %s702 = scalar_lea.vmem [#allocation15], %s701
        // Predicated region
        $region101: #{tpu_custom_call.1} parent=71 // pred_check
          %p703 = pneg %p309
        $region102: #{tpu_custom_call.1} parent=71 // pred_check_branch
          %705 = sbr.rel (%p703) target = $region104
        $region103: #{tpu_custom_call.1} parent=71 // pred_region
          %706 = dma.done %s699, 4096
        $region104: #{tpu_custom_call.1} parent=71 // pred_fallthru
          _
        %s707 = sand.u32 %s42, 1
        %s708 = scalar_lea.sflag [#allocation16], %s707
        %s709 = sand.u32 %s348, 1
        %s710 = smul.addr %s709, 256
        %s711 = scalar_lea.vmem [#allocation17], %s710
        // Predicated region
        $region105: #{tpu_custom_call.1} parent=71 // pred_check
          %p712 = pneg %p361
        $region106: #{tpu_custom_call.1} parent=71 // pred_check_branch
          %714 = sbr.rel (%p712) target = $region108
        $region107: #{tpu_custom_call.1} parent=71 // pred_region
          %715 = dma.done %s708, 4096
        $region108: #{tpu_custom_call.1} parent=71 // pred_fallthru
          _
        %s716 = sand.u32 %s62, 1
        %s717 = scalar_lea.sflag [#allocation4], %s716
        %s718 = sand.u32 %s62, 1
        %s719 = smul.addr %s718, 32
        %s720 = scalar_lea.vmem [#allocation3], %s719
        %p721 = pneg %p75
        %p722 = pneg %p72
        %s723 = sand.u32 %s42, 1
        %s724 = scalar_lea.sflag [#allocation7], %s723
        %s725 = sand.u32 %s88, 1
        %s726 = scalar_lea.vmem [#allocation6], %s725
        %p727 = pneg %p101
        %p728 = pneg %p98
        %s729 = sand.u32 %s42, 1
        %s730 = scalar_lea.sflag [#allocation7], %s729
        %s731 = sand.u32 %s114, 1
        %s732 = scalar_lea.vmem [#allocation8], %s731
        %p733 = pneg %p127
        %p734 = pneg %p124
        %s735 = sand.u32 %s42, 1
        %s736 = scalar_lea.sflag [#allocation10], %s735
        %s737 = sand.u32 %s140, 1
        %s738 = smul.addr %s737, 192
        %s739 = scalar_lea.vmem [#allocation9], %s738
        %p740 = pneg %p153
        %p741 = pneg %p150
        %p742 = scmp.lt.s32.totalorder %s47, 1
        %s743 = scalar_select %p742, %s47, 1
        %s744 = smul.addr %s743, 3
        %s745 = scalar_lea.vmem %s4, %s744
        %p746 = pneg %p179
        %p747 = pneg %p176
        %s748 = sand.u32 %s42, 1
        %s749 = scalar_lea.sflag [#allocation10], %s748
        %s750 = sand.u32 %s192, 1
        %s751 = smul.addr %s750, 64
        %s752 = scalar_lea.vmem [#allocation11], %s751
        %p753 = pneg %p205
        %p754 = pneg %p202
        %p755 = scmp.lt.s32.totalorder %s47, 1
        %s756 = scalar_select %p755, %s47, 1
        %s757 = scalar_lea.vmem %s6, %s756
        %p758 = pneg %p231
        %p759 = pneg %p228
        %s760 = sand.u32 %s42, 1
        %s761 = scalar_lea.sflag [#allocation13], %s760
        %s762 = sand.u32 %s244, 1
        %s763 = scalar_lea.vmem [#allocation12], %s762
        %p764 = pneg %p257
        %p765 = pneg %p254
        %s766 = sand.u32 %s42, 1
        %s767 = scalar_lea.sflag [#allocation13], %s766
        %s768 = sand.u32 %s270, 1
        %s769 = scalar_lea.vmem [#allocation14], %s768
        %p770 = pneg %p283
        %p771 = pneg %p280
        %s772 = sand.u32 %s42, 1
        %s773 = scalar_lea.sflag [#allocation16], %s772
        %s774 = sand.u32 %s296, 1
        %s775 = smul.addr %s774, 256
        %s776 = scalar_lea.vmem [#allocation15], %s775
        %p777 = pneg %p309
        %p778 = pneg %p306
        %p779 = scmp.lt.s32.totalorder %s47, 1
        %s780 = scalar_select %p779, %s47, 1
        %s781 = smul.addr %s780, 4
        %s782 = scalar_lea.vmem %s10, %s781
        %p783 = pneg %p335
        %p784 = pneg %p332
        %s785 = sand.u32 %s42, 1
        %s786 = scalar_lea.sflag [#allocation16], %s785
        %s787 = sand.u32 %s348, 1
        %s788 = smul.addr %s787, 256
        %s789 = scalar_lea.vmem [#allocation17], %s788
        %p790 = pneg %p361
        %p791 = pneg %p358
        %p792 = scmp.lt.s32.totalorder %s47, 1
        %s793 = scalar_select %p792, %s47, 1
        %s794 = scalar_lea.vmem %s12, %s793
        %p795 = pneg %p387
        %p796 = pneg %p384
        %p797 = pneg %p413
        %p798 = pneg %p410
        %s799 = sand.u32 %s400, 1
        %s800 = scalar_lea.sflag [#allocation5], %s799
        %s801 = sand.u32 %s400, 1
        %s802 = smul.addr %s801, 32
        %s803 = scalar_lea.vmem [#allocation18], %s802
        %s804 = smul.u32 2, %s46
        %p805 = scmp.lt.s32.totalorder %s47, 1
        %s806 = scalar_select %p805, %s47, 1
        %s807 = smul.addr %s806, 3
        %s808 = scalar_lea.vmem %s4, %s807
        %p809 = scmp.lt.s32.totalorder %s47, 1
        %s810 = scalar_select %p809, %s47, 1
        %s811 = scalar_lea.vmem %s6, %s810
        %p812 = scmp.lt.s32.totalorder %s47, 1
        %s813 = scalar_select %p812, %s47, 1
        %s814 = smul.addr %s813, 4
        %s815 = scalar_lea.vmem %s10, %s814
        %p816 = scmp.lt.s32.totalorder %s47, 1
        %s817 = scalar_select %p816, %s47, 1
        %s818 = scalar_lea.vmem %s12, %s817
        %s819 = smul.u32 2, %s46
        %p821 = scmp.eq.s32.totalorder %s47, 0
        // Predicated region
        $region109: #{tpu_custom_call.1} parent=71 // pred_check
          %p822 = pneg %p821
        $region110: #{tpu_custom_call.1} parent=71 // pred_check_branch
          %824 = sbr.rel (%p822) target = $region112
        $region111: #{tpu_custom_call.1} parent=71 // pred_region
          %v825 = vld [vmem:[%s643] sm:$0xff]
          %v826 = vld [vmem:[%s643 + $0x8] sm:$0xff]
          %v827 = vld [vmem:[%s643 + $0x10] sm:$0xff]
          %v828 = vld [vmem:[%s643 + $0x18] sm:$0xff]
          %829 = vst [vmem:[#allocation2] sm:$0xff] %v825
          %830 = vst [vmem:[#allocation2 + $0x8] sm:$0xff] %v826
          %831 = vst [vmem:[#allocation2 + $0x10] sm:$0xff] %v827
          %832 = vst [vmem:[#allocation2 + $0x18] sm:$0xff] %v828
        $region112: #{tpu_custom_call.1} parent=71 // pred_fallthru
          _
        %v833 = vld [vmem:[#allocation2] sm:$0xff]
        %v834 = vld [vmem:[#allocation2 + $0x8] sm:$0xff]
        %v835 = vld [vmem:[#allocation2 + $0x10] sm:$0xff]
        %v836 = vld [vmem:[#allocation2 + $0x18] sm:$0xff]
        %v837 = vld [vmem:[%s651] sm:$0x1]
        %v838 = vld [vmem:[%s659] sm:$0x1]
        %839 = vadd.xlane.f32.xlu0 %v833
        %v840 = vpop.xlane.xlu0 %839
        %841 = vadd.xlane.f32.xlu0 %v834
        %v842 = vpop.xlane.xlu0 %841
        %843 = vadd.xlane.f32.xlu0 %v835
        %v844 = vpop.xlane.xlu0 %843
        %845 = vadd.xlane.f32.xlu0 %v836
        %v846 = vpop.xlane.xlu0 %845
        %v847 = vrcp.pop 128.0
        %v848 = vmul.f32 %v840, %v847
        %v849 = vmul.f32 %v842, %v847
        %v850 = vmul.f32 %v844, %v847
        %v851 = vmul.f32 %v846, %v847
        %v852 = vsub.f32 %v833, %v848
        %v853 = vsub.f32 %v834, %v849
        %v854 = vsub.f32 %v835, %v850
        %v855 = vsub.f32 %v836, %v851
        %v856 = vmul.f32 %v852, %v852
        %v857 = vmul.f32 %v853, %v853
        %v858 = vmul.f32 %v854, %v854
        %v859 = vmul.f32 %v855, %v855
        %860 = vadd.xlane.f32.xlu0 %v856
        %v861 = vpop.xlane.xlu0 %860
        %862 = vadd.xlane.f32.xlu0 %v857
        %v863 = vpop.xlane.xlu0 %862
        %864 = vadd.xlane.f32.xlu0 %v858
        %v865 = vpop.xlane.xlu0 %864
        %866 = vadd.xlane.f32.xlu0 %v859
        %v867 = vpop.xlane.xlu0 %866
        %v868 = vmul.f32 %v861, %v847
        %v869 = vmul.f32 %v863, %v847
        %v870 = vmul.f32 %v865, %v847
        %v871 = vmul.f32 %v867, %v847
        %v872 = vadd.f32 %v868, 1e-05
        %v873 = vadd.f32 %v869, 1e-05
        %v874 = vadd.f32 %v870, 1e-05
        %v875 = vadd.f32 %v871, 1e-05
        %v876 = vrsqrt.pop %v872
        %v877 = vrsqrt.pop %v873
        %v878 = vrsqrt.pop %v874
        %v879 = vrsqrt.pop %v875
        %v880 = vmul.f32 %v852, %v876
        %v881 = vmul.f32 %v853, %v877
        %v882 = vmul.f32 %v854, %v878
        %v883 = vmul.f32 %v855, %v879
        %v885 = vlaneseq
        %v886 = vshrl.u32 %v885, 7
        %v887 = vsub.s32 0, %v886
        %v888 = vrot.slane %v837, %v887
        %v890 = vmul.f32 %v880, %v888
        %v891 = vmul.f32 %v881, %v888
        %v892 = vmul.f32 %v882, %v888
        %v893 = vmul.f32 %v883, %v888
        %v895 = vlaneseq
        %v896 = vshrl.u32 %v895, 7
        %v897 = vsub.s32 0, %v896
        %v898 = vrot.slane %v838, %v897
        %v900 = vadd.f32 %v890, %v898
        %v901 = vadd.f32 %v891, %v898
        %v902 = vadd.f32 %v892, %v898
        %v903 = vadd.f32 %v893, %v898
        %v904 = vpack.c.bf16 %v901, %v900
        %v905 = vpack.c.bf16 %v903, %v902
        %v906 = vld [vmem:[%s668] sm:$0xff]
        %v907 = vld [vmem:[%s668 + $0x8] sm:$0xf]
        %v908 = vld [vmem:[%s668 + $0xc] sm:$0xff]
        %v909 = vld [vmem:[%s668 + $0x14] sm:$0xf]
        %v910 = vld [vmem:[%s668 + $0x18] sm:$0xff]
        %v911 = vld [vmem:[%s668 + $0x20] sm:$0xf]
        %v912 = vld [vmem:[%s668 + $0x24] sm:$0xff]
        %v913 = vld [vmem:[%s668 + $0x2c] sm:$0xf]
        %v914 = vld [vmem:[%s668 + $0x30] sm:$0xff]
        %v915 = vld [vmem:[%s668 + $0x38] sm:$0xf]
        %v916 = vld [vmem:[%s668 + $0x3c] sm:$0xff]
        %v917 = vld [vmem:[%s668 + $0x44] sm:$0xf]
        %v918 = vld [vmem:[%s668 + $0x48] sm:$0xff]
        %v919 = vld [vmem:[%s668 + $0x50] sm:$0xf]
        %v920 = vld [vmem:[%s668 + $0x54] sm:$0xff]
        %v921 = vld [vmem:[%s668 + $0x5c] sm:$0xf]
        %v922 = vld [vmem:[%s668 + $0x60] sm:$0xff]
        %v923 = vld [vmem:[%s668 + $0x68] sm:$0xf]
        %v924 = vld [vmem:[%s668 + $0x6c] sm:$0xff]
        %v925 = vld [vmem:[%s668 + $0x74] sm:$0xf]
        %v926 = vld [vmem:[%s668 + $0x78] sm:$0xff]
        %v927 = vld [vmem:[%s668 + $0x80] sm:$0xf]
        %v928 = vld [vmem:[%s668 + $0x84] sm:$0xff]
        %v929 = vld [vmem:[%s668 + $0x8c] sm:$0xf]
        %v930 = vld [vmem:[%s668 + $0x90] sm:$0xff]
        %v931 = vld [vmem:[%s668 + $0x98] sm:$0xf]
        %v932 = vld [vmem:[%s668 + $0x9c] sm:$0xff]
        %v933 = vld [vmem:[%s668 + $0xa4] sm:$0xf]
        %v934 = vld [vmem:[%s668 + $0xa8] sm:$0xff]
        %v935 = vld [vmem:[%s668 + $0xb0] sm:$0xf]
        %v936 = vld [vmem:[%s668 + $0xb4] sm:$0xff]
        %v937 = vld [vmem:[%s668 + $0xbc] sm:$0xf]
        %v938 = vld [vmem:[%s808] sm:$0x7]
        %v940 = vlaneseq
        %v941 = vshrl.u32 %v940, 7
        %v942 = vsub.s32 0, %v941
        %v943 = vrot.slane %v938, %v942
        %v944 = vlaneseq
        %v945 = vshrl.u32 %v944, 7
        %v946 = vsub.s32 1, %v945
        %v947 = vrot.slane %v938, %v946
        %v948 = vlaneseq
        %v949 = vshrl.u32 %v948, 7
        %v950 = vsub.s32 2, %v949
        %v951 = vrot.slane %v938, %v950
        %v987 = vunpack.c.l.b16 %v906
        %v988 = vunpack.c.h.b16 %v906
        %v989 = vunpack.c.l.b16 %v907
        %v990 = vunpack.c.l.b16 %v908
        %v991 = vunpack.c.h.b16 %v908
        %v992 = vunpack.c.l.b16 %v909
        %v993 = vunpack.c.l.b16 %v910
        %v994 = vunpack.c.h.b16 %v910
        %v995 = vunpack.c.l.b16 %v911
        %v996 = vunpack.c.l.b16 %v912
        %v997 = vunpack.c.h.b16 %v912
        %v998 = vunpack.c.l.b16 %v913
        %v999 = vunpack.c.l.b16 %v914
        %v1000 = vunpack.c.h.b16 %v914
        %v1001 = vunpack.c.l.b16 %v915
        %v1002 = vunpack.c.l.b16 %v916
        %v1003 = vunpack.c.h.b16 %v916
        %v1004 = vunpack.c.l.b16 %v917
        %v1005 = vunpack.c.l.b16 %v918
        %v1006 = vunpack.c.h.b16 %v918
        %v1007 = vunpack.c.l.b16 %v919
        %v1008 = vunpack.c.l.b16 %v920
        %v1009 = vunpack.c.h.b16 %v920
        %v1010 = vunpack.c.l.b16 %v921
        %v1011 = vunpack.c.l.b16 %v922
        %v1012 = vunpack.c.h.b16 %v922
        %v1013 = vunpack.c.l.b16 %v923
        %v1014 = vunpack.c.l.b16 %v924
        %v1015 = vunpack.c.h.b16 %v924
        %v1016 = vunpack.c.l.b16 %v925
        %v1017 = vunpack.c.l.b16 %v926
        %v1018 = vunpack.c.h.b16 %v926
        %v1019 = vunpack.c.l.b16 %v927
        %v1020 = vunpack.c.l.b16 %v928
        %v1021 = vunpack.c.h.b16 %v928
        %v1022 = vunpack.c.l.b16 %v929
        %v1023 = vunpack.c.l.b16 %v930
        %v1024 = vunpack.c.h.b16 %v930
        %v1025 = vunpack.c.l.b16 %v931
        %v1026 = vunpack.c.l.b16 %v932
        %v1027 = vunpack.c.h.b16 %v932
        %v1028 = vunpack.c.l.b16 %v933
        %v1029 = vunpack.c.l.b16 %v934
        %v1030 = vunpack.c.h.b16 %v934
        %v1031 = vunpack.c.l.b16 %v935
        %v1032 = vunpack.c.l.b16 %v936
        %v1033 = vunpack.c.h.b16 %v936
        %v1034 = vunpack.c.l.b16 %v937
        %v1035 = vpack.c.b16 %v990, %v987
        %v1036 = vpack.c.b16 %v991, %v988
        %v1037 = vpack.c.b16 %v992, %v989
        %v1038 = vpack.c.b16 %v996, %v993
        %v1039 = vpack.c.b16 %v997, %v994
        %v1040 = vpack.c.b16 %v998, %v995
        %v1041 = vpack.c.b16 %v1002, %v999
        %v1042 = vpack.c.b16 %v1003, %v1000
        %v1043 = vpack.c.b16 %v1004, %v1001
        %v1044 = vpack.c.b16 %v1008, %v1005
        %v1045 = vpack.c.b16 %v1009, %v1006
        %v1046 = vpack.c.b16 %v1010, %v1007
        %v1047 = vpack.c.b16 %v1014, %v1011
        %v1048 = vpack.c.b16 %v1015, %v1012
        %v1049 = vpack.c.b16 %v1016, %v1013
        %v1050 = vpack.c.b16 %v1020, %v1017
        %v1051 = vpack.c.b16 %v1021, %v1018
        %v1052 = vpack.c.b16 %v1022, %v1019
        %v1053 = vpack.c.b16 %v1026, %v1023
        %v1054 = vpack.c.b16 %v1027, %v1024
        %v1055 = vpack.c.b16 %v1028, %v1025
        %v1056 = vpack.c.b16 %v1032, %v1029
        %v1057 = vpack.c.b16 %v1033, %v1030
        %v1058 = vpack.c.b16 %v1034, %v1031
        %1083 = vmatprep.subr.bf16.mxu0 %v1057
        %1084 = vmatpush1.bf16.msra.mxu0 %v1056
        %1085 = vmatprep.subr.bf16.mxu0 %v1054
        %1086 = vmatpush1.bf16.msra.mxu0 %v1053
        %1087 = vmatprep.subr.bf16.mxu0 %v1051
        %1088 = vmatpush1.bf16.msra.mxu0 %v1050
        %1089 = vmatprep.subr.bf16.mxu0 %v1048
        %1090 = vmatpush1.bf16.msra.mxu0 %v1047
        %1091 = vmatprep.subr.bf16.mxu0 %v1045
        %1092 = vmatpush1.bf16.msra.mxu0 %v1044
        %1093 = vmatprep.subr.bf16.mxu0 %v1042
        %1094 = vmatpush1.bf16.msra.mxu0 %v1041
        %1095 = vmatprep.subr.bf16.mxu0 %v1039
        %1096 = vmatpush1.bf16.msra.mxu0 %v1038
        %1097 = vmatprep.subr.bf16.mxu0 %v1036
        %1098 = vmatpush1.bf16.msra.mxu0 %v1035
        %1099 = vmatprep.subr.bf16.mxu0 0
        %1100 = vmatpush2.bf16.msra.mxu0 0
        %1101 = vmatprep.subr.bf16.mxu0 0
        %1102 = vmatpush2.bf16.msra.mxu0 0
        %1103 = vmatprep.subr.bf16.mxu0 0
        %1104 = vmatpush2.bf16.msra.mxu0 0
        %1105 = vmatprep.subr.bf16.mxu0 0
        %1106 = vmatpush2.bf16.msra.mxu0 0
        %1107 = vmatprep.subr.bf16.mxu0 0
        %1108 = vmatpush2.bf16.msra.mxu0 0
        %1109 = vmatprep.subr.bf16.mxu0 0
        %1110 = vmatpush2.bf16.msra.mxu0 0
        %1111 = vmatprep.subr.bf16.mxu0 0
        %1112 = vmatpush2.bf16.msra.mxu0 0
        %1113 = vmatprep.subr.bf16.mxu0 0
        %1114 = vmatpush2.bf16.msra.mxu0 0
        %1115 = vmatprep.mubr.bf16.mxu0 0
        %1116 = vmatmul.mubr.bf16.gmra.mxu0 %v904
        %v1117 = vpop.f32.mrf.mxu0
        %v1118 = vadd.f32 %v943, %v1117
        %v1119 = vpop.f32.mrf.mxu0
        %v1120 = vadd.f32 %v947, %v1119
        %v1121 = vpop.f32.mrf.mxu0
        %v1122 = vadd.f32 %v943, %v1121
        %v1123 = vpop.f32.mrf.mxu0
        %v1124 = vadd.f32 %v947, %v1123
        %1125 = vmatprep.mubr.bf16.mxu0 0
        %1126 = vmatmul.mubr.bf16.gmra.mxu0 %v905
        %v1127 = vpop.f32.mrf.mxu0
        %v1128 = vadd.f32 %v943, %v1127
        %v1129 = vpop.f32.mrf.mxu0
        %v1130 = vadd.f32 %v947, %v1129
        %v1131 = vpop.f32.mrf.mxu0
        %v1132 = vadd.f32 %v943, %v1131
        %v1133 = vpop.f32.mrf.mxu0
        %v1134 = vadd.f32 %v947, %v1133
        %1135 = vdwg.mxu0
        %1136 = vmatprep.subr.bf16.mxu0 0
        %1137 = vmatpush1.bf16.msra.mxu0 %v1058
        %1138 = vmatprep.subr.bf16.mxu0 0
        %1139 = vmatpush1.bf16.msra.mxu0 %v1055
        %1140 = vmatprep.subr.bf16.mxu0 0
        %1141 = vmatpush1.bf16.msra.mxu0 %v1052
        %1142 = vmatprep.subr.bf16.mxu0 0
        %1143 = vmatpush1.bf16.msra.mxu0 %v1049
        %1144 = vmatprep.subr.bf16.mxu0 0
        %1145 = vmatpush1.bf16.msra.mxu0 %v1046
        %1146 = vmatprep.subr.bf16.mxu0 0
        %1147 = vmatpush1.bf16.msra.mxu0 %v1043
        %1148 = vmatprep.subr.bf16.mxu0 0
        %1149 = vmatpush1.bf16.msra.mxu0 %v1040
        %1150 = vmatprep.subr.bf16.mxu0 0
        %1151 = vmatpush1.bf16.msra.mxu0 %v1037
        %1152 = vmatprep.subr.bf16.mxu0 0
        %1153 = vmatpush2.bf16.msra.mxu0 0
        %1154 = vmatprep.subr.bf16.mxu0 0
        %1155 = vmatpush2.bf16.msra.mxu0 0
        %1156 = vmatprep.subr.bf16.mxu0 0
        %1157 = vmatpush2.bf16.msra.mxu0 0
        %1158 = vmatprep.subr.bf16.mxu0 0
        %1159 = vmatpush2.bf16.msra.mxu0 0
        %1160 = vmatprep.subr.bf16.mxu0 0
        %1161 = vmatpush2.bf16.msra.mxu0 0
        %1162 = vmatprep.subr.bf16.mxu0 0
        %1163 = vmatpush2.bf16.msra.mxu0 0
        %1164 = vmatprep.subr.bf16.mxu0 0
        %1165 = vmatpush2.bf16.msra.mxu0 0
        %1166 = vmatprep.subr.bf16.mxu0 0
        %1167 = vmatpush2.bf16.msra.mxu0 0
        %1168 = vmatprep.mubr.bf16.mxu0 0
        %1169 = vmatmul.mubr.bf16.gmra.mxu0 %v904
        %v1170 = vpop.f32.mrf.mxu0
        %v1171 = vadd.f32 %v951, %v1170
        %v1172 = vpop.f32.mrf.mxu0
        %v1173 = vpop.f32.mrf.mxu0
        %v1174 = vadd.f32 %v951, %v1173
        %v1175 = vpop.f32.mrf.mxu0
        %1176 = vmatprep.mubr.bf16.mxu0 0
        %1177 = vmatmul.mubr.bf16.gmra.mxu0 %v905
        %v1178 = vpop.f32.mrf.mxu0
        %v1179 = vadd.f32 %v951, %v1178
        %v1180 = vpop.f32.mrf.mxu0
        %v1181 = vpop.f32.mrf.mxu0
        %v1182 = vadd.f32 %v951, %v1181
        %v1183 = vpop.f32.mrf.mxu0
        %1184 = vdwg.mxu0
        %v1185 = vpack.c.bf16 %v1122, %v1118
        %v1186 = vpack.c.bf16 %v1132, %v1128
        %v1187 = vpack.c.bf16 %v1124, %v1120
        %v1188 = vpack.c.bf16 %v1134, %v1130
        %v1189 = vpack.c.bf16 %v1174, %v1171
        %v1190 = vpack.c.bf16 %v1182, %v1179
        %vm1191 = vcmask 523264
        %v1193 = vsel %vm1191, %v1185, 0
        %v1196 = vsel %vm1191, %v1187, 0
        %1198 = vmatprep.subr.bf16.mxu0 0
        %1199 = vmatpush1.bf16.xpose.msra.mxu0 0
        %1200 = vmatprep.subr.bf16.mxu0 0
        %1201 = vmatpush1.bf16.xpose.msra.mxu0 0
        %1202 = vmatprep.subr.bf16.mxu0 0
        %1203 = vmatpush1.bf16.xpose.msra.mxu0 0
        %1204 = vmatprep.subr.bf16.mxu0 0
        %1205 = vmatpush1.bf16.xpose.msra.mxu0 0
        %1206 = vmatprep.subr.bf16.mxu0 0
        %1207 = vmatpush1.bf16.xpose.msra.mxu0 0
        %1208 = vmatprep.subr.bf16.mxu0 0
        %1209 = vmatpush1.bf16.xpose.msra.mxu0 0
        %1210 = vmatprep.subr.bf16.mxu0 0
        %1211 = vmatpush1.bf16.xpose.msra.mxu0 0
        %1212 = vmatprep.subr.bf16.mxu0 0
        %1213 = vmatpush1.bf16.xpose.msra.mxu0 %v1196
        %1214 = vmatprep.subr.bf16.mxu0 0
        %1215 = vmatpush2.bf16.xpose.msra.mxu0 0
        %1216 = vmatprep.subr.bf16.mxu0 0
        %1217 = vmatpush2.bf16.xpose.msra.mxu0 0
        %1218 = vmatprep.subr.bf16.mxu0 0
        %1219 = vmatpush2.bf16.xpose.msra.mxu0 0
        %1220 = vmatprep.subr.bf16.mxu0 0
        %1221 = vmatpush2.bf16.xpose.msra.mxu0 0
        %1222 = vmatprep.subr.bf16.mxu0 0
        %1223 = vmatpush2.bf16.xpose.msra.mxu0 0
        %1224 = vmatprep.subr.bf16.mxu0 0
        %1225 = vmatpush2.bf16.xpose.msra.mxu0 0
        %1226 = vmatprep.subr.bf16.mxu0 0
        %1227 = vmatpush2.bf16.xpose.msra.mxu0 0
        %1228 = vmatprep.subr.bf16.mxu0 0
        %1229 = vmatpush2.bf16.xpose.msra.mxu0 0
        %1230 = vmatprep.mubr.bf16.mxu0 0
        %1231 = vmatmul.mubr.bf16.gmra.mxu0 %v1193
        %v1232 = vpop.f32.mrf.mxu0
        %v1233 = vadd.f32 0.0, %v1232
        %v1234 = vpop.f32.mrf.mxu0
        %v1235 = vpop.f32.mrf.mxu0
        %v1236 = vadd.f32 0.0, %v1235
        %v1237 = vpop.f32.mrf.mxu0
        %1238 = vdwg.mxu0
        %v1240 = vsel %vm1191, %v1186, 0
        %v1243 = vsel %vm1191, %v1188, 0
        %1245 = vmatprep.subr.bf16.mxu0 0
        %1246 = vmatpush1.bf16.xpose.msra.mxu0 0
        %1247 = vmatprep.subr.bf16.mxu0 0
        %1248 = vmatpush1.bf16.xpose.msra.mxu0 0
        %1249 = vmatprep.subr.bf16.mxu0 0
        %1250 = vmatpush1.bf16.xpose.msra.mxu0 0
        %1251 = vmatprep.subr.bf16.mxu0 0
        %1252 = vmatpush1.bf16.xpose.msra.mxu0 0
        %1253 = vmatprep.subr.bf16.mxu0 0
        %1254 = vmatpush1.bf16.xpose.msra.mxu0 0
        %1255 = vmatprep.subr.bf16.mxu0 0
        %1256 = vmatpush1.bf16.xpose.msra.mxu0 0
        %1257 = vmatprep.subr.bf16.mxu0 0
        %1258 = vmatpush1.bf16.xpose.msra.mxu0 0
        %1259 = vmatprep.subr.bf16.mxu0 0
        %1260 = vmatpush1.bf16.xpose.msra.mxu0 %v1243
        %1261 = vmatprep.subr.bf16.mxu0 0
        %1262 = vmatpush2.bf16.xpose.msra.mxu0 0
        %1263 = vmatprep.subr.bf16.mxu0 0
        %1264 = vmatpush2.bf16.xpose.msra.mxu0 0
        %1265 = vmatprep.subr.bf16.mxu0 0
        %1266 = vmatpush2.bf16.xpose.msra.mxu0 0
        %1267 = vmatprep.subr.bf16.mxu0 0
        %1268 = vmatpush2.bf16.xpose.msra.mxu0 0
        %1269 = vmatprep.subr.bf16.mxu0 0
        %1270 = vmatpush2.bf16.xpose.msra.mxu0 0
        %1271 = vmatprep.subr.bf16.mxu0 0
        %1272 = vmatpush2.bf16.xpose.msra.mxu0 0
        %1273 = vmatprep.subr.bf16.mxu0 0
        %1274 = vmatpush2.bf16.xpose.msra.mxu0 0
        %1275 = vmatprep.subr.bf16.mxu0 0
        %1276 = vmatpush2.bf16.xpose.msra.mxu0 0
        %1277 = vmatprep.mubr.bf16.mxu0 0
        %1278 = vmatmul.mubr.bf16.gmra.mxu0 %v1240
        %v1279 = vpop.f32.mrf.mxu0
        %v1280 = vadd.f32 0.0, %v1279
        %v1281 = vpop.f32.mrf.mxu0
        %v1282 = vpop.f32.mrf.mxu0
        %v1283 = vadd.f32 0.0, %v1282
        %v1284 = vpop.f32.mrf.mxu0
        %1285 = vdwg.mxu0
        %vm1286 = vcmask 130048
        %v1287 = vsel %vm1286, %v1233, -inf
        %1288 = vmax.xlane.f32.xlu0 %v1287
        %v1289 = vpop.xlane.xlu0 %1288
        %v1290 = vsel %vm1286, %v1236, -inf
        %1291 = vmax.xlane.f32.xlu0 %v1290
        %v1292 = vpop.xlane.xlu0 %1291
        %v1293 = vsel %vm1286, %v1280, -inf
        %1294 = vmax.xlane.f32.xlu0 %v1293
        %v1295 = vpop.xlane.xlu0 %1294
        %v1296 = vsel %vm1286, %v1283, -inf
        %1297 = vmax.xlane.f32.xlu0 %v1296
        %v1298 = vpop.xlane.xlu0 %1297
        %v1299 = vsub.f32 %v1233, %v1289
        %v1300 = vsub.f32 %v1236, %v1292
        %v1301 = vsub.f32 %v1280, %v1295
        %v1302 = vsub.f32 %v1283, %v1298
        %v1303 = vmul.f32 %v1299, 1.442695
        %v1304 = vpow.pop %v1303
        %v1305 = vmul.f32 %v1300, 1.442695
        %v1306 = vpow.pop %v1305
        %v1307 = vmul.f32 %v1301, 1.442695
        %v1308 = vpow.pop %v1307
        %v1309 = vmul.f32 %v1302, 1.442695
        %v1310 = vpow.pop %v1309
        %v1311 = vsel %vm1286, %v1304, 0.0
        %1312 = vadd.xlane.f32.xlu0 %v1311
        %v1313 = vpop.xlane.xlu0 %1312
        %v1314 = vsel %vm1286, %v1306, 0.0
        %1315 = vadd.xlane.f32.xlu0 %v1314
        %v1316 = vpop.xlane.xlu0 %1315
        %v1317 = vsel %vm1286, %v1308, 0.0
        %1318 = vadd.xlane.f32.xlu0 %v1317
        %v1319 = vpop.xlane.xlu0 %1318
        %v1320 = vsel %vm1286, %v1310, 0.0
        %1321 = vadd.xlane.f32.xlu0 %v1320
        %v1322 = vpop.xlane.xlu0 %1321
        %v1323 = vrcp.pop %v1313
        %v1324 = vrcp.pop %v1316
        %v1325 = vrcp.pop %v1319
        %v1326 = vrcp.pop %v1322
        %v1327 = vmul.f32 %v1304, %v1323
        %v1328 = vmul.f32 %v1306, %v1324
        %v1329 = vmul.f32 %v1308, %v1325
        %v1330 = vmul.f32 %v1310, %v1326
        %v1331 = vpack.c.bf16 %v1328, %v1327
        %v1332 = vpack.c.bf16 %v1330, %v1329
        %v1334 = vsel %vm1286, %v1331, 0
        %1336 = vmatprep.subr.bf16.mxu0 0
        %1337 = vmatpush1.bf16.msra.mxu0 0
        %1338 = vmatprep.subr.bf16.mxu0 0
        %1339 = vmatpush1.bf16.msra.mxu0 0
        %1340 = vmatprep.subr.bf16.mxu0 0
        %1341 = vmatpush1.bf16.msra.mxu0 0
        %1342 = vmatprep.subr.bf16.mxu0 0
        %1343 = vmatpush1.bf16.msra.mxu0 0
        %1344 = vmatprep.subr.bf16.mxu0 0
        %1345 = vmatpush1.bf16.msra.mxu0 0
        %1346 = vmatprep.subr.bf16.mxu0 0
        %1347 = vmatpush1.bf16.msra.mxu0 0
        %1348 = vmatprep.subr.bf16.mxu0 0
        %1349 = vmatpush1.bf16.msra.mxu0 0
        %1350 = vmatprep.subr.bf16.mxu0 0
        %1351 = vmatpush1.bf16.msra.mxu0 %v1189
        %1352 = vmatprep.subr.bf16.mxu0 0
        %1353 = vmatpush2.bf16.msra.mxu0 0
        %1354 = vmatprep.subr.bf16.mxu0 0
        %1355 = vmatpush2.bf16.msra.mxu0 0
        %1356 = vmatprep.subr.bf16.mxu0 0
        %1357 = vmatpush2.bf16.msra.mxu0 0
        %1358 = vmatprep.subr.bf16.mxu0 0
        %1359 = vmatpush2.bf16.msra.mxu0 0
        %1360 = vmatprep.subr.bf16.mxu0 0
        %1361 = vmatpush2.bf16.msra.mxu0 0
        %1362 = vmatprep.subr.bf16.mxu0 0
        %1363 = vmatpush2.bf16.msra.mxu0 0
        %1364 = vmatprep.subr.bf16.mxu0 0
        %1365 = vmatpush2.bf16.msra.mxu0 0
        %1366 = vmatprep.subr.bf16.mxu0 0
        %1367 = vmatpush2.bf16.msra.mxu0 0
        %1368 = vmatprep.mubr.bf16.mxu0 0
        %1369 = vmatmul.mubr.bf16.gmra.mxu0 %v1334
        %v1370 = vpop.f32.mrf.mxu0
        %v1371 = vadd.f32 0.0, %v1370
        %v1372 = vpop.f32.mrf.mxu0
        %v1373 = vpop.f32.mrf.mxu0
        %v1374 = vadd.f32 0.0, %v1373
        %v1375 = vpop.f32.mrf.mxu0
        %1376 = vdwg.mxu0
        %v1378 = vsel %vm1286, %v1332, 0
        %1380 = vmatprep.subr.bf16.mxu0 0
        %1381 = vmatpush1.bf16.msra.mxu0 0
        %1382 = vmatprep.subr.bf16.mxu0 0
        %1383 = vmatpush1.bf16.msra.mxu0 0
        %1384 = vmatprep.subr.bf16.mxu0 0
        %1385 = vmatpush1.bf16.msra.mxu0 0
        %1386 = vmatprep.subr.bf16.mxu0 0
        %1387 = vmatpush1.bf16.msra.mxu0 0
        %1388 = vmatprep.subr.bf16.mxu0 0
        %1389 = vmatpush1.bf16.msra.mxu0 0
        %1390 = vmatprep.subr.bf16.mxu0 0
        %1391 = vmatpush1.bf16.msra.mxu0 0
        %1392 = vmatprep.subr.bf16.mxu0 0
        %1393 = vmatpush1.bf16.msra.mxu0 0
        %1394 = vmatprep.subr.bf16.mxu0 0
        %1395 = vmatpush1.bf16.msra.mxu0 %v1190
        %1396 = vmatprep.subr.bf16.mxu0 0
        %1397 = vmatpush2.bf16.msra.mxu0 0
        %1398 = vmatprep.subr.bf16.mxu0 0
        %1399 = vmatpush2.bf16.msra.mxu0 0
        %1400 = vmatprep.subr.bf16.mxu0 0
        %1401 = vmatpush2.bf16.msra.mxu0 0
        %1402 = vmatprep.subr.bf16.mxu0 0
        %1403 = vmatpush2.bf16.msra.mxu0 0
        %1404 = vmatprep.subr.bf16.mxu0 0
        %1405 = vmatpush2.bf16.msra.mxu0 0
        %1406 = vmatprep.subr.bf16.mxu0 0
        %1407 = vmatpush2.bf16.msra.mxu0 0
        %1408 = vmatprep.subr.bf16.mxu0 0
        %1409 = vmatpush2.bf16.msra.mxu0 0
        %1410 = vmatprep.subr.bf16.mxu0 0
        %1411 = vmatpush2.bf16.msra.mxu0 0
        %1412 = vmatprep.mubr.bf16.mxu0 0
        %1413 = vmatmul.mubr.bf16.gmra.mxu0 %v1378
        %v1414 = vpop.f32.mrf.mxu0
        %v1415 = vadd.f32 0.0, %v1414
        %v1416 = vpop.f32.mrf.mxu0
        %v1417 = vpop.f32.mrf.mxu0
        %v1418 = vadd.f32 0.0, %v1417
        %v1419 = vpop.f32.mrf.mxu0
        %1420 = vdwg.mxu0
        %v1421 = vpack.c.bf16 %v1374, %v1371
        %v1422 = vpack.c.bf16 %v1418, %v1415
        %1424 = vrot.lane.b32.xlu0 %v1185, 64
        %v1425 = vpop.permute.xlu0 %1424
        %1427 = vrot.lane.b32.xlu0 %v1187, 64
        %v1428 = vpop.permute.xlu0 %1427
        %v1430 = vsel %vm1191, %v1425, 0
        %v1433 = vsel %vm1191, %v1428, 0
        %1435 = vmatprep.subr.bf16.mxu0 0
        %1436 = vmatpush1.bf16.xpose.msra.mxu0 0
        %1437 = vmatprep.subr.bf16.mxu0 0
        %1438 = vmatpush1.bf16.xpose.msra.mxu0 0
        %1439 = vmatprep.subr.bf16.mxu0 0
        %1440 = vmatpush1.bf16.xpose.msra.mxu0 0
        %1441 = vmatprep.subr.bf16.mxu0 0
        %1442 = vmatpush1.bf16.xpose.msra.mxu0 0
        %1443 = vmatprep.subr.bf16.mxu0 0
        %1444 = vmatpush1.bf16.xpose.msra.mxu0 0
        %1445 = vmatprep.subr.bf16.mxu0 0
        %1446 = vmatpush1.bf16.xpose.msra.mxu0 0
        %1447 = vmatprep.subr.bf16.mxu0 0
        %1448 = vmatpush1.bf16.xpose.msra.mxu0 0
        %1449 = vmatprep.subr.bf16.mxu0 0
        %1450 = vmatpush1.bf16.xpose.msra.mxu0 %v1433
        %1451 = vmatprep.subr.bf16.mxu0 0
        %1452 = vmatpush2.bf16.xpose.msra.mxu0 0
        %1453 = vmatprep.subr.bf16.mxu0 0
        %1454 = vmatpush2.bf16.xpose.msra.mxu0 0
        %1455 = vmatprep.subr.bf16.mxu0 0
        %1456 = vmatpush2.bf16.xpose.msra.mxu0 0
        %1457 = vmatprep.subr.bf16.mxu0 0
        %1458 = vmatpush2.bf16.xpose.msra.mxu0 0
        %1459 = vmatprep.subr.bf16.mxu0 0
        %1460 = vmatpush2.bf16.xpose.msra.mxu0 0
        %1461 = vmatprep.subr.bf16.mxu0 0
        %1462 = vmatpush2.bf16.xpose.msra.mxu0 0
        %1463 = vmatprep.subr.bf16.mxu0 0
        %1464 = vmatpush2.bf16.xpose.msra.mxu0 0
        %1465 = vmatprep.subr.bf16.mxu0 0
        %1466 = vmatpush2.bf16.xpose.msra.mxu0 0
        %1467 = vmatprep.mubr.bf16.mxu0 0
        %1468 = vmatmul.mubr.bf16.gmra.mxu0 %v1430
        %v1469 = vpop.f32.mrf.mxu0
        %v1470 = vadd.f32 0.0, %v1469
        %v1471 = vpop.f32.mrf.mxu0
        %v1472 = vpop.f32.mrf.mxu0
        %v1473 = vadd.f32 0.0, %v1472
        %v1474 = vpop.f32.mrf.mxu0
        %1475 = vdwg.mxu0
        %1477 = vrot.lane.b32.xlu0 %v1186, 64
        %v1478 = vpop.permute.xlu0 %1477
        %1480 = vrot.lane.b32.xlu0 %v1188, 64
        %v1481 = vpop.permute.xlu0 %1480
        %v1483 = vsel %vm1191, %v1478, 0
        %v1486 = vsel %vm1191, %v1481, 0
        %1488 = vmatprep.subr.bf16.mxu0 0
        %1489 = vmatpush1.bf16.xpose.msra.mxu0 0
        %1490 = vmatprep.subr.bf16.mxu0 0
        %1491 = vmatpush1.bf16.xpose.msra.mxu0 0
        %1492 = vmatprep.subr.bf16.mxu0 0
        %1493 = vmatpush1.bf16.xpose.msra.mxu0 0
        %1494 = vmatprep.subr.bf16.mxu0 0
        %1495 = vmatpush1.bf16.xpose.msra.mxu0 0
        %1496 = vmatprep.subr.bf16.mxu0 0
        %1497 = vmatpush1.bf16.xpose.msra.mxu0 0
        %1498 = vmatprep.subr.bf16.mxu0 0
        %1499 = vmatpush1.bf16.xpose.msra.mxu0 0
        %1500 = vmatprep.subr.bf16.mxu0 0
        %1501 = vmatpush1.bf16.xpose.msra.mxu0 0
        %1502 = vmatprep.subr.bf16.mxu0 0
        %1503 = vmatpush1.bf16.xpose.msra.mxu0 %v1486
        %1504 = vmatprep.subr.bf16.mxu0 0
        %1505 = vmatpush2.bf16.xpose.msra.mxu0 0
        %1506 = vmatprep.subr.bf16.mxu0 0
        %1507 = vmatpush2.bf16.xpose.msra.mxu0 0
        %1508 = vmatprep.subr.bf16.mxu0 0
        %1509 = vmatpush2.bf16.xpose.msra.mxu0 0
        %1510 = vmatprep.subr.bf16.mxu0 0
        %1511 = vmatpush2.bf16.xpose.msra.mxu0 0
        %1512 = vmatprep.subr.bf16.mxu0 0
        %1513 = vmatpush2.bf16.xpose.msra.mxu0 0
        %1514 = vmatprep.subr.bf16.mxu0 0
        %1515 = vmatpush2.bf16.xpose.msra.mxu0 0
        %1516 = vmatprep.subr.bf16.mxu0 0
        %1517 = vmatpush2.bf16.xpose.msra.mxu0 0
        %1518 = vmatprep.subr.bf16.mxu0 0
        %1519 = vmatpush2.bf16.xpose.msra.mxu0 0
        %1520 = vmatprep.mubr.bf16.mxu0 0
        %1521 = vmatmul.mubr.bf16.gmra.mxu0 %v1483
        %v1522 = vpop.f32.mrf.mxu0
        %v1523 = vadd.f32 0.0, %v1522
        %v1524 = vpop.f32.mrf.mxu0
        %v1525 = vpop.f32.mrf.mxu0
        %v1526 = vadd.f32 0.0, %v1525
        %v1527 = vpop.f32.mrf.mxu0
        %1528 = vdwg.mxu0
        %v1529 = vsel %vm1286, %v1470, -inf
        %1530 = vmax.xlane.f32.xlu0 %v1529
        %v1531 = vpop.xlane.xlu0 %1530
        %v1532 = vsel %vm1286, %v1473, -inf
        %1533 = vmax.xlane.f32.xlu0 %v1532
        %v1534 = vpop.xlane.xlu0 %1533
        %v1535 = vsel %vm1286, %v1523, -inf
        %1536 = vmax.xlane.f32.xlu0 %v1535
        %v1537 = vpop.xlane.xlu0 %1536
        %v1538 = vsel %vm1286, %v1526, -inf
        %1539 = vmax.xlane.f32.xlu0 %v1538
        %v1540 = vpop.xlane.xlu0 %1539
        %v1541 = vsub.f32 %v1470, %v1531
        %v1542 = vsub.f32 %v1473, %v1534
        %v1543 = vsub.f32 %v1523, %v1537
        %v1544 = vsub.f32 %v1526, %v1540
        %v1545 = vmul.f32 %v1541, 1.442695
        %v1546 = vpow.pop %v1545
        %v1547 = vmul.f32 %v1542, 1.442695
        %v1548 = vpow.pop %v1547
        %v1549 = vmul.f32 %v1543, 1.442695
        %v1550 = vpow.pop %v1549
        %v1551 = vmul.f32 %v1544, 1.442695
        %v1552 = vpow.pop %v1551
        %v1553 = vsel %vm1286, %v1546, 0.0
        %1554 = vadd.xlane.f32.xlu0 %v1553
        %v1555 = vpop.xlane.xlu0 %1554
        %v1556 = vsel %vm1286, %v1548, 0.0
        %1557 = vadd.xlane.f32.xlu0 %v1556
        %v1558 = vpop.xlane.xlu0 %1557
        %v1559 = vsel %vm1286, %v1550, 0.0
        %1560 = vadd.xlane.f32.xlu0 %v1559
        %v1561 = vpop.xlane.xlu0 %1560
        %v1562 = vsel %vm1286, %v1552, 0.0
        %1563 = vadd.xlane.f32.xlu0 %v1562
        %v1564 = vpop.xlane.xlu0 %1563
        %v1565 = vrcp.pop %v1555
        %v1566 = vrcp.pop %v1558
        %v1567 = vrcp.pop %v1561
        %v1568 = vrcp.pop %v1564
        %v1569 = vmul.f32 %v1546, %v1565
        %v1570 = vmul.f32 %v1548, %v1566
        %v1571 = vmul.f32 %v1550, %v1567
        %v1572 = vmul.f32 %v1552, %v1568
        %v1573 = vpack.c.bf16 %v1570, %v1569
        %v1574 = vpack.c.bf16 %v1572, %v1571
        %1576 = vrot.lane.b32.xlu0 %v1189, 64
        %v1577 = vpop.permute.xlu0 %1576
        %v1580 = vsel %vm1286, %v1573, 0
        %1582 = vmatprep.subr.bf16.mxu0 0
        %1583 = vmatpush1.bf16.msra.mxu0 0
        %1584 = vmatprep.subr.bf16.mxu0 0
        %1585 = vmatpush1.bf16.msra.mxu0 0
        %1586 = vmatprep.subr.bf16.mxu0 0
        %1587 = vmatpush1.bf16.msra.mxu0 0
        %1588 = vmatprep.subr.bf16.mxu0 0
        %1589 = vmatpush1.bf16.msra.mxu0 0
        %1590 = vmatprep.subr.bf16.mxu0 0
        %1591 = vmatpush1.bf16.msra.mxu0 0
        %1592 = vmatprep.subr.bf16.mxu0 0
        %1593 = vmatpush1.bf16.msra.mxu0 0
        %1594 = vmatprep.subr.bf16.mxu0 0
        %1595 = vmatpush1.bf16.msra.mxu0 0
        %1596 = vmatprep.subr.bf16.mxu0 0
        %1597 = vmatpush1.bf16.msra.mxu0 %v1577
        %1598 = vmatprep.subr.bf16.mxu0 0
        %1599 = vmatpush2.bf16.msra.mxu0 0
        %1600 = vmatprep.subr.bf16.mxu0 0
        %1601 = vmatpush2.bf16.msra.mxu0 0
        %1602 = vmatprep.subr.bf16.mxu0 0
        %1603 = vmatpush2.bf16.msra.mxu0 0
        %1604 = vmatprep.subr.bf16.mxu0 0
        %1605 = vmatpush2.bf16.msra.mxu0 0
        %1606 = vmatprep.subr.bf16.mxu0 0
        %1607 = vmatpush2.bf16.msra.mxu0 0
        %1608 = vmatprep.subr.bf16.mxu0 0
        %1609 = vmatpush2.bf16.msra.mxu0 0
        %1610 = vmatprep.subr.bf16.mxu0 0
        %1611 = vmatpush2.bf16.msra.mxu0 0
        %1612 = vmatprep.subr.bf16.mxu0 0
        %1613 = vmatpush2.bf16.msra.mxu0 0
        %1614 = vmatprep.mubr.bf16.mxu0 0
        %1615 = vmatmul.mubr.bf16.gmra.mxu0 %v1580
        %v1616 = vpop.f32.mrf.mxu0
        %v1617 = vadd.f32 0.0, %v1616
        %v1618 = vpop.f32.mrf.mxu0
        %v1619 = vpop.f32.mrf.mxu0
        %v1620 = vadd.f32 0.0, %v1619
        %v1621 = vpop.f32.mrf.mxu0
        %1622 = vdwg.mxu0
        %1624 = vrot.lane.b32.xlu0 %v1190, 64
        %v1625 = vpop.permute.xlu0 %1624
        %v1628 = vsel %vm1286, %v1574, 0
        %1630 = vmatprep.subr.bf16.mxu0 0
        %1631 = vmatpush1.bf16.msra.mxu0 0
        %1632 = vmatprep.subr.bf16.mxu0 0
        %1633 = vmatpush1.bf16.msra.mxu0 0
        %1634 = vmatprep.subr.bf16.mxu0 0
        %1635 = vmatpush1.bf16.msra.mxu0 0
        %1636 = vmatprep.subr.bf16.mxu0 0
        %1637 = vmatpush1.bf16.msra.mxu0 0
        %1638 = vmatprep.subr.bf16.mxu0 0
        %1639 = vmatpush1.bf16.msra.mxu0 0
        %1640 = vmatprep.subr.bf16.mxu0 0
        %1641 = vmatpush1.bf16.msra.mxu0 0
        %1642 = vmatprep.subr.bf16.mxu0 0
        %1643 = vmatpush1.bf16.msra.mxu0 0
        %1644 = vmatprep.subr.bf16.mxu0 0
        %1645 = vmatpush1.bf16.msra.mxu0 %v1625
        %1646 = vmatprep.subr.bf16.mxu0 0
        %1647 = vmatpush2.bf16.msra.mxu0 0
        %1648 = vmatprep.subr.bf16.mxu0 0
        %1649 = vmatpush2.bf16.msra.mxu0 0
        %1650 = vmatprep.subr.bf16.mxu0 0
        %1651 = vmatpush2.bf16.msra.mxu0 0
        %1652 = vmatprep.subr.bf16.mxu0 0
        %1653 = vmatpush2.bf16.msra.mxu0 0
        %1654 = vmatprep.subr.bf16.mxu0 0
        %1655 = vmatpush2.bf16.msra.mxu0 0
        %1656 = vmatprep.subr.bf16.mxu0 0
        %1657 = vmatpush2.bf16.msra.mxu0 0
        %1658 = vmatprep.subr.bf16.mxu0 0
        %1659 = vmatpush2.bf16.msra.mxu0 0
        %1660 = vmatprep.subr.bf16.mxu0 0
        %1661 = vmatpush2.bf16.msra.mxu0 0
        %1662 = vmatprep.mubr.bf16.mxu0 0
        %1663 = vmatmul.mubr.bf16.gmra.mxu0 %v1628
        %v1664 = vpop.f32.mrf.mxu0
        %v1665 = vadd.f32 0.0, %v1664
        %v1666 = vpop.f32.mrf.mxu0
        %v1667 = vpop.f32.mrf.mxu0
        %v1668 = vadd.f32 0.0, %v1667
        %v1669 = vpop.f32.mrf.mxu0
        %1670 = vdwg.mxu0
        %v1671 = vpack.c.bf16 %v1620, %v1617
        %v1672 = vpack.c.bf16 %v1668, %v1665
        %1675 = vrot.lane.b32.xlu0 %v1671, 64
        %v1676 = vpop.permute.xlu0 %1675
        %1677 = vrot.lane.b32.xlu0 %v1672, 64
        %v1678 = vpop.permute.xlu0 %1677
        %v1681 = vsel %vm1191, %v1421, %v1676
        %v1685 = vsel %vm1191, %v1422, %v1678
        %v1687 = vld [vmem:[%s677] sm:$0xf]
        %v1688 = vld [vmem:[%s677 + $0x4] sm:$0xf]
        %v1689 = vld [vmem:[%s677 + $0x8] sm:$0xf]
        %v1690 = vld [vmem:[%s677 + $0xc] sm:$0xf]
        %v1691 = vld [vmem:[%s677 + $0x10] sm:$0xf]
        %v1692 = vld [vmem:[%s677 + $0x14] sm:$0xf]
        %v1693 = vld [vmem:[%s677 + $0x18] sm:$0xf]
        %v1694 = vld [vmem:[%s677 + $0x1c] sm:$0xf]
        %v1695 = vld [vmem:[%s677 + $0x20] sm:$0xf]
        %v1696 = vld [vmem:[%s677 + $0x24] sm:$0xf]
        %v1697 = vld [vmem:[%s677 + $0x28] sm:$0xf]
        %v1698 = vld [vmem:[%s677 + $0x2c] sm:$0xf]
        %v1699 = vld [vmem:[%s677 + $0x30] sm:$0xf]
        %v1700 = vld [vmem:[%s677 + $0x34] sm:$0xf]
        %v1701 = vld [vmem:[%s677 + $0x38] sm:$0xf]
        %v1702 = vld [vmem:[%s677 + $0x3c] sm:$0xf]
        %v1703 = vld [vmem:[%s811] sm:$0x1]
        %v1705 = vlaneseq
        %v1706 = vshrl.u32 %v1705, 7
        %v1707 = vsub.s32 0, %v1706
        %v1708 = vrot.slane %v1703, %v1707
        %v1726 = vunpack.c.l.b16 %v1687
        %v1727 = vunpack.c.l.b16 %v1688
        %v1728 = vunpack.c.l.b16 %v1689
        %v1729 = vunpack.c.l.b16 %v1690
        %v1730 = vunpack.c.l.b16 %v1691
        %v1731 = vunpack.c.l.b16 %v1692
        %v1732 = vunpack.c.l.b16 %v1693
        %v1733 = vunpack.c.l.b16 %v1694
        %v1734 = vunpack.c.l.b16 %v1695
        %v1735 = vunpack.c.l.b16 %v1696
        %v1736 = vunpack.c.l.b16 %v1697
        %v1737 = vunpack.c.l.b16 %v1698
        %v1738 = vunpack.c.l.b16 %v1699
        %v1739 = vunpack.c.l.b16 %v1700
        %v1740 = vunpack.c.l.b16 %v1701
        %v1741 = vunpack.c.l.b16 %v1702
        %v1742 = vpack.c.b16 %v1727, %v1726
        %v1743 = vpack.c.b16 %v1729, %v1728
        %v1744 = vpack.c.b16 %v1731, %v1730
        %v1745 = vpack.c.b16 %v1733, %v1732
        %v1746 = vpack.c.b16 %v1735, %v1734
        %v1747 = vpack.c.b16 %v1737, %v1736
        %v1748 = vpack.c.b16 %v1739, %v1738
        %v1749 = vpack.c.b16 %v1741, %v1740
        %1758 = vmatprep.subr.bf16.mxu0 0
        %1759 = vmatpush1.bf16.msra.mxu0 %v1749
        %1760 = vmatprep.subr.bf16.mxu0 0
        %1761 = vmatpush1.bf16.msra.mxu0 %v1748
        %1762 = vmatprep.subr.bf16.mxu0 0
        %1763 = vmatpush1.bf16.msra.mxu0 %v1747
        %1764 = vmatprep.subr.bf16.mxu0 0
        %1765 = vmatpush1.bf16.msra.mxu0 %v1746
        %1766 = vmatprep.subr.bf16.mxu0 0
        %1767 = vmatpush1.bf16.msra.mxu0 %v1745
        %1768 = vmatprep.subr.bf16.mxu0 0
        %1769 = vmatpush1.bf16.msra.mxu0 %v1744
        %1770 = vmatprep.subr.bf16.mxu0 0
        %1771 = vmatpush1.bf16.msra.mxu0 %v1743
        %1772 = vmatprep.subr.bf16.mxu0 0
        %1773 = vmatpush1.bf16.msra.mxu0 %v1742
        %1774 = vmatprep.subr.bf16.mxu0 0
        %1775 = vmatpush2.bf16.msra.mxu0 0
        %1776 = vmatprep.subr.bf16.mxu0 0
        %1777 = vmatpush2.bf16.msra.mxu0 0
        %1778 = vmatprep.subr.bf16.mxu0 0
        %1779 = vmatpush2.bf16.msra.mxu0 0
        %1780 = vmatprep.subr.bf16.mxu0 0
        %1781 = vmatpush2.bf16.msra.mxu0 0
        %1782 = vmatprep.subr.bf16.mxu0 0
        %1783 = vmatpush2.bf16.msra.mxu0 0
        %1784 = vmatprep.subr.bf16.mxu0 0
        %1785 = vmatpush2.bf16.msra.mxu0 0
        %1786 = vmatprep.subr.bf16.mxu0 0
        %1787 = vmatpush2.bf16.msra.mxu0 0
        %1788 = vmatprep.subr.bf16.mxu0 0
        %1789 = vmatpush2.bf16.msra.mxu0 0
        %1790 = vmatprep.mubr.bf16.mxu0 0
        %1791 = vmatmul.mubr.bf16.gmra.mxu0 %v1681
        %v1792 = vpop.f32.mrf.mxu0
        %v1793 = vadd.f32 %v1708, %v1792
        %v1794 = vpop.f32.mrf.mxu0
        %v1795 = vpop.f32.mrf.mxu0
        %v1796 = vadd.f32 %v1708, %v1795
        %v1797 = vpop.f32.mrf.mxu0
        %1798 = vmatprep.mubr.bf16.mxu0 0
        %1799 = vmatmul.mubr.bf16.gmra.mxu0 %v1685
        %v1800 = vpop.f32.mrf.mxu0
        %v1801 = vadd.f32 %v1708, %v1800
        %v1802 = vpop.f32.mrf.mxu0
        %v1803 = vpop.f32.mrf.mxu0
        %v1804 = vadd.f32 %v1708, %v1803
        %v1805 = vpop.f32.mrf.mxu0
        %1806 = vdwg.mxu0
        %v1807 = vadd.f32 %v833, %v1793
        %v1808 = vadd.f32 %v834, %v1796
        %v1809 = vadd.f32 %v835, %v1801
        %v1810 = vadd.f32 %v836, %v1804
        %v1811 = vld [vmem:[%s685] sm:$0x1]
        %v1812 = vld [vmem:[%s693] sm:$0x1]
        %1813 = vadd.xlane.f32.xlu0 %v1807
        %v1814 = vpop.xlane.xlu0 %1813
        %1815 = vadd.xlane.f32.xlu0 %v1808
        %v1816 = vpop.xlane.xlu0 %1815
        %1817 = vadd.xlane.f32.xlu0 %v1809
        %v1818 = vpop.xlane.xlu0 %1817
        %1819 = vadd.xlane.f32.xlu0 %v1810
        %v1820 = vpop.xlane.xlu0 %1819
        %v1821 = vmul.f32 %v1814, %v847
        %v1822 = vmul.f32 %v1816, %v847
        %v1823 = vmul.f32 %v1818, %v847
        %v1824 = vmul.f32 %v1820, %v847
        %v1825 = vsub.f32 %v1807, %v1821
        %v1826 = vsub.f32 %v1808, %v1822
        %v1827 = vsub.f32 %v1809, %v1823
        %v1828 = vsub.f32 %v1810, %v1824
        %v1829 = vmul.f32 %v1825, %v1825
        %v1830 = vmul.f32 %v1826, %v1826
        %v1831 = vmul.f32 %v1827, %v1827
        %v1832 = vmul.f32 %v1828, %v1828
        %1833 = vadd.xlane.f32.xlu0 %v1829
        %v1834 = vpop.xlane.xlu0 %1833
        %1835 = vadd.xlane.f32.xlu0 %v1830
        %v1836 = vpop.xlane.xlu0 %1835
        %1837 = vadd.xlane.f32.xlu0 %v1831
        %v1838 = vpop.xlane.xlu0 %1837
        %1839 = vadd.xlane.f32.xlu0 %v1832
        %v1840 = vpop.xlane.xlu0 %1839
        %v1841 = vmul.f32 %v1834, %v847
        %v1842 = vmul.f32 %v1836, %v847
        %v1843 = vmul.f32 %v1838, %v847
        %v1844 = vmul.f32 %v1840, %v847
        %v1845 = vadd.f32 %v1841, 1e-05
        %v1846 = vadd.f32 %v1842, 1e-05
        %v1847 = vadd.f32 %v1843, 1e-05
        %v1848 = vadd.f32 %v1844, 1e-05
        %v1849 = vrsqrt.pop %v1845
        %v1850 = vrsqrt.pop %v1846
        %v1851 = vrsqrt.pop %v1847
        %v1852 = vrsqrt.pop %v1848
        %v1853 = vmul.f32 %v1825, %v1849
        %v1854 = vmul.f32 %v1826, %v1850
        %v1855 = vmul.f32 %v1827, %v1851
        %v1856 = vmul.f32 %v1828, %v1852
        %v1858 = vlaneseq
        %v1859 = vshrl.u32 %v1858, 7
        %v1860 = vsub.s32 0, %v1859
        %v1861 = vrot.slane %v1811, %v1860
        %v1863 = vmul.f32 %v1853, %v1861
        %v1864 = vmul.f32 %v1854, %v1861
        %v1865 = vmul.f32 %v1855, %v1861
        %v1866 = vmul.f32 %v1856, %v1861
        %v1868 = vlaneseq
        %v1869 = vshrl.u32 %v1868, 7
        %v1870 = vsub.s32 0, %v1869
        %v1871 = vrot.slane %v1812, %v1870
        %v1873 = vadd.f32 %v1863, %v1871
        %v1874 = vadd.f32 %v1864, %v1871
        %v1875 = vadd.f32 %v1865, %v1871
        %v1876 = vadd.f32 %v1866, %v1871
        %v1877 = vpack.c.bf16 %v1874, %v1873
        %v1878 = vpack.c.bf16 %v1876, %v1875
        %v1879 = vld [vmem:[%s702] sm:$0xff]
        %v1880 = vld [vmem:[%s702 + $0x8] sm:$0xff]
        %v1881 = vld [vmem:[%s702 + $0x10] sm:$0xff]
        %v1882 = vld [vmem:[%s702 + $0x18] sm:$0xff]
        %v1883 = vld [vmem:[%s702 + $0x20] sm:$0xff]
        %v1884 = vld [vmem:[%s702 + $0x28] sm:$0xff]
        %v1885 = vld [vmem:[%s702 + $0x30] sm:$0xff]
        %v1886 = vld [vmem:[%s702 + $0x38] sm:$0xff]
        %v1887 = vld [vmem:[%s702 + $0x40] sm:$0xff]
        %v1888 = vld [vmem:[%s702 + $0x48] sm:$0xff]
        %v1889 = vld [vmem:[%s702 + $0x50] sm:$0xff]
        %v1890 = vld [vmem:[%s702 + $0x58] sm:$0xff]
        %v1891 = vld [vmem:[%s702 + $0x60] sm:$0xff]
        %v1892 = vld [vmem:[%s702 + $0x68] sm:$0xff]
        %v1893 = vld [vmem:[%s702 + $0x70] sm:$0xff]
        %v1894 = vld [vmem:[%s702 + $0x78] sm:$0xff]
        %v1895 = vld [vmem:[%s702 + $0x80] sm:$0xff]
        %v1896 = vld [vmem:[%s702 + $0x88] sm:$0xff]
        %v1897 = vld [vmem:[%s702 + $0x90] sm:$0xff]
        %v1898 = vld [vmem:[%s702 + $0x98] sm:$0xff]
        %v1899 = vld [vmem:[%s702 + $0xa0] sm:$0xff]
        %v1900 = vld [vmem:[%s702 + $0xa8] sm:$0xff]
        %v1901 = vld [vmem:[%s702 + $0xb0] sm:$0xff]
        %v1902 = vld [vmem:[%s702 + $0xb8] sm:$0xff]
        %v1903 = vld [vmem:[%s702 + $0xc0] sm:$0xff]
        %v1904 = vld [vmem:[%s702 + $0xc8] sm:$0xff]
        %v1905 = vld [vmem:[%s702 + $0xd0] sm:$0xff]
        %v1906 = vld [vmem:[%s702 + $0xd8] sm:$0xff]
        %v1907 = vld [vmem:[%s702 + $0xe0] sm:$0xff]
        %v1908 = vld [vmem:[%s702 + $0xe8] sm:$0xff]
        %v1909 = vld [vmem:[%s702 + $0xf0] sm:$0xff]
        %v1910 = vld [vmem:[%s702 + $0xf8] sm:$0xff]
        %v1911 = vld [vmem:[%s815] sm:$0xf]
        %v1913 = vlaneseq
        %v1914 = vshrl.u32 %v1913, 7
        %v1915 = vsub.s32 0, %v1914
        %v1916 = vrot.slane %v1911, %v1915
        %v1917 = vlaneseq
        %v1918 = vshrl.u32 %v1917, 7
        %v1919 = vsub.s32 1, %v1918
        %v1920 = vrot.slane %v1911, %v1919
        %v1921 = vlaneseq
        %v1922 = vshrl.u32 %v1921, 7
        %v1923 = vsub.s32 2, %v1922
        %v1924 = vrot.slane %v1911, %v1923
        %v1925 = vlaneseq
        %v1926 = vshrl.u32 %v1925, 7
        %v1927 = vsub.s32 3, %v1926
        %v1928 = vrot.slane %v1911, %v1927
        %v1965 = vunpack.c.l.b16 %v1879
        %v1966 = vunpack.c.h.b16 %v1879
        %v1967 = vunpack.c.l.b16 %v1880
        %v1968 = vunpack.c.h.b16 %v1880
        %v1969 = vunpack.c.l.b16 %v1881
        %v1970 = vunpack.c.h.b16 %v1881
        %v1971 = vunpack.c.l.b16 %v1882
        %v1972 = vunpack.c.h.b16 %v1882
        %v1973 = vunpack.c.l.b16 %v1883
        %v1974 = vunpack.c.h.b16 %v1883
        %v1975 = vunpack.c.l.b16 %v1884
        %v1976 = vunpack.c.h.b16 %v1884
        %v1977 = vunpack.c.l.b16 %v1885
        %v1978 = vunpack.c.h.b16 %v1885
        %v1979 = vunpack.c.l.b16 %v1886
        %v1980 = vunpack.c.h.b16 %v1886
        %v1981 = vunpack.c.l.b16 %v1887
        %v1982 = vunpack.c.h.b16 %v1887
        %v1983 = vunpack.c.l.b16 %v1888
        %v1984 = vunpack.c.h.b16 %v1888
        %v1985 = vunpack.c.l.b16 %v1889
        %v1986 = vunpack.c.h.b16 %v1889
        %v1987 = vunpack.c.l.b16 %v1890
        %v1988 = vunpack.c.h.b16 %v1890
        %v1989 = vunpack.c.l.b16 %v1891
        %v1990 = vunpack.c.h.b16 %v1891
        %v1991 = vunpack.c.l.b16 %v1892
        %v1992 = vunpack.c.h.b16 %v1892
        %v1993 = vunpack.c.l.b16 %v1893
        %v1994 = vunpack.c.h.b16 %v1893
        %v1995 = vunpack.c.l.b16 %v1894
        %v1996 = vunpack.c.h.b16 %v1894
        %v1997 = vunpack.c.l.b16 %v1895
        %v1998 = vunpack.c.h.b16 %v1895
        %v1999 = vunpack.c.l.b16 %v1896
        %v2000 = vunpack.c.h.b16 %v1896
        %v2001 = vunpack.c.l.b16 %v1897
        %v2002 = vunpack.c.h.b16 %v1897
        %v2003 = vunpack.c.l.b16 %v1898
        %v2004 = vunpack.c.h.b16 %v1898
        %v2005 = vunpack.c.l.b16 %v1899
        %v2006 = vunpack.c.h.b16 %v1899
        %v2007 = vunpack.c.l.b16 %v1900
        %v2008 = vunpack.c.h.b16 %v1900
        %v2009 = vunpack.c.l.b16 %v1901
        %v2010 = vunpack.c.h.b16 %v1901
        %v2011 = vunpack.c.l.b16 %v1902
        %v2012 = vunpack.c.h.b16 %v1902
        %v2013 = vunpack.c.l.b16 %v1903
        %v2014 = vunpack.c.h.b16 %v1903
        %v2015 = vunpack.c.l.b16 %v1904
        %v2016 = vunpack.c.h.b16 %v1904
        %v2017 = vunpack.c.l.b16 %v1905
        %v2018 = vunpack.c.h.b16 %v1905
        %v2019 = vunpack.c.l.b16 %v1906
        %v2020 = vunpack.c.h.b16 %v1906
        %v2021 = vunpack.c.l.b16 %v1907
        %v2022 = vunpack.c.h.b16 %v1907
        %v2023 = vunpack.c.l.b16 %v1908
        %v2024 = vunpack.c.h.b16 %v1908
        %v2025 = vunpack.c.l.b16 %v1909
        %v2026 = vunpack.c.h.b16 %v1909
        %v2027 = vunpack.c.l.b16 %v1910
        %v2028 = vunpack.c.h.b16 %v1910
        %v2029 = vpack.c.b16 %v1969, %v1965
        %v2030 = vpack.c.b16 %v1970, %v1966
        %v2031 = vpack.c.b16 %v1971, %v1967
        %v2032 = vpack.c.b16 %v1972, %v1968
        %v2033 = vpack.c.b16 %v1977, %v1973
        %v2034 = vpack.c.b16 %v1978, %v1974
        %v2035 = vpack.c.b16 %v1979, %v1975
        %v2036 = vpack.c.b16 %v1980, %v1976
        %v2037 = vpack.c.b16 %v1985, %v1981
        %v2038 = vpack.c.b16 %v1986, %v1982
        %v2039 = vpack.c.b16 %v1987, %v1983
        %v2040 = vpack.c.b16 %v1988, %v1984
        %v2041 = vpack.c.b16 %v1993, %v1989
        %v2042 = vpack.c.b16 %v1994, %v1990
        %v2043 = vpack.c.b16 %v1995, %v1991
        %v2044 = vpack.c.b16 %v1996, %v1992
        %v2045 = vpack.c.b16 %v2001, %v1997
        %v2046 = vpack.c.b16 %v2002, %v1998
        %v2047 = vpack.c.b16 %v2003, %v1999
        %v2048 = vpack.c.b16 %v2004, %v2000
        %v2049 = vpack.c.b16 %v2009, %v2005
        %v2050 = vpack.c.b16 %v2010, %v2006
        %v2051 = vpack.c.b16 %v2011, %v2007
        %v2052 = vpack.c.b16 %v2012, %v2008
        %v2053 = vpack.c.b16 %v2017, %v2013
        %v2054 = vpack.c.b16 %v2018, %v2014
        %v2055 = vpack.c.b16 %v2019, %v2015
        %v2056 = vpack.c.b16 %v2020, %v2016
        %v2057 = vpack.c.b16 %v2025, %v2021
        %v2058 = vpack.c.b16 %v2026, %v2022
        %v2059 = vpack.c.b16 %v2027, %v2023
        %v2060 = vpack.c.b16 %v2028, %v2024
        %2093 = vmatprep.subr.bf16.mxu0 %v2058
        %2094 = vmatpush1.bf16.msra.mxu0 %v2057
        %2095 = vmatprep.subr.bf16.mxu0 %v2054
        %2096 = vmatpush1.bf16.msra.mxu0 %v2053
        %2097 = vmatprep.subr.bf16.mxu0 %v2050
        %2098 = vmatpush1.bf16.msra.mxu0 %v2049
        %2099 = vmatprep.subr.bf16.mxu0 %v2046
        %2100 = vmatpush1.bf16.msra.mxu0 %v2045
        %2101 = vmatprep.subr.bf16.mxu0 %v2042
        %2102 = vmatpush1.bf16.msra.mxu0 %v2041
        %2103 = vmatprep.subr.bf16.mxu0 %v2038
        %2104 = vmatpush1.bf16.msra.mxu0 %v2037
        %2105 = vmatprep.subr.bf16.mxu0 %v2034
        %2106 = vmatpush1.bf16.msra.mxu0 %v2033
        %2107 = vmatprep.subr.bf16.mxu0 %v2030
        %2108 = vmatpush1.bf16.msra.mxu0 %v2029
        %2109 = vmatprep.subr.bf16.mxu0 0
        %2110 = vmatpush2.bf16.msra.mxu0 0
        %2111 = vmatprep.subr.bf16.mxu0 0
        %2112 = vmatpush2.bf16.msra.mxu0 0
        %2113 = vmatprep.subr.bf16.mxu0 0
        %2114 = vmatpush2.bf16.msra.mxu0 0
        %2115 = vmatprep.subr.bf16.mxu0 0
        %2116 = vmatpush2.bf16.msra.mxu0 0
        %2117 = vmatprep.subr.bf16.mxu0 0
        %2118 = vmatpush2.bf16.msra.mxu0 0
        %2119 = vmatprep.subr.bf16.mxu0 0
        %2120 = vmatpush2.bf16.msra.mxu0 0
        %2121 = vmatprep.subr.bf16.mxu0 0
        %2122 = vmatpush2.bf16.msra.mxu0 0
        %2123 = vmatprep.subr.bf16.mxu0 0
        %2124 = vmatpush2.bf16.msra.mxu0 0
        %2125 = vmatprep.mubr.bf16.mxu0 0
        %2126 = vmatmul.mubr.bf16.gmra.mxu0 %v1877
        %v2127 = vpop.f32.mrf.mxu0
        %v2128 = vadd.f32 %v1916, %v2127
        %v2129 = vpop.f32.mrf.mxu0
        %v2130 = vadd.f32 %v1920, %v2129
        %v2131 = vpop.f32.mrf.mxu0
        %v2132 = vadd.f32 %v1916, %v2131
        %v2133 = vpop.f32.mrf.mxu0
        %v2134 = vadd.f32 %v1920, %v2133
        %2135 = vmatprep.mubr.bf16.mxu0 0
        %2136 = vmatmul.mubr.bf16.gmra.mxu0 %v1878
        %v2137 = vpop.f32.mrf.mxu0
        %v2138 = vadd.f32 %v1916, %v2137
        %v2139 = vpop.f32.mrf.mxu0
        %v2140 = vadd.f32 %v1920, %v2139
        %v2141 = vpop.f32.mrf.mxu0
        %v2142 = vadd.f32 %v1916, %v2141
        %v2143 = vpop.f32.mrf.mxu0
        %v2144 = vadd.f32 %v1920, %v2143
        %2145 = vdwg.mxu0
        %2146 = vmatprep.subr.bf16.mxu0 %v2060
        %2147 = vmatpush1.bf16.msra.mxu0 %v2059
        %2148 = vmatprep.subr.bf16.mxu0 %v2056
        %2149 = vmatpush1.bf16.msra.mxu0 %v2055
        %2150 = vmatprep.subr.bf16.mxu0 %v2052
        %2151 = vmatpush1.bf16.msra.mxu0 %v2051
        %2152 = vmatprep.subr.bf16.mxu0 %v2048
        %2153 = vmatpush1.bf16.msra.mxu0 %v2047
        %2154 = vmatprep.subr.bf16.mxu0 %v2044
        %2155 = vmatpush1.bf16.msra.mxu0 %v2043
        %2156 = vmatprep.subr.bf16.mxu0 %v2040
        %2157 = vmatpush1.bf16.msra.mxu0 %v2039
        %2158 = vmatprep.subr.bf16.mxu0 %v2036
        %2159 = vmatpush1.bf16.msra.mxu0 %v2035
        %2160 = vmatprep.subr.bf16.mxu0 %v2032
        %2161 = vmatpush1.bf16.msra.mxu0 %v2031
        %2162 = vmatprep.subr.bf16.mxu0 0
        %2163 = vmatpush2.bf16.msra.mxu0 0
        %2164 = vmatprep.subr.bf16.mxu0 0
        %2165 = vmatpush2.bf16.msra.mxu0 0
        %2166 = vmatprep.subr.bf16.mxu0 0
        %2167 = vmatpush2.bf16.msra.mxu0 0
        %2168 = vmatprep.subr.bf16.mxu0 0
        %2169 = vmatpush2.bf16.msra.mxu0 0
        %2170 = vmatprep.subr.bf16.mxu0 0
        %2171 = vmatpush2.bf16.msra.mxu0 0
        %2172 = vmatprep.subr.bf16.mxu0 0
        %2173 = vmatpush2.bf16.msra.mxu0 0
        %2174 = vmatprep.subr.bf16.mxu0 0
        %2175 = vmatpush2.bf16.msra.mxu0 0
        %2176 = vmatprep.subr.bf16.mxu0 0
        %2177 = vmatpush2.bf16.msra.mxu0 0
        %2178 = vmatprep.mubr.bf16.mxu0 0
        %2179 = vmatmul.mubr.bf16.gmra.mxu0 %v1877
        %v2180 = vpop.f32.mrf.mxu0
        %v2181 = vadd.f32 %v1924, %v2180
        %v2182 = vpop.f32.mrf.mxu0
        %v2183 = vadd.f32 %v1928, %v2182
        %v2184 = vpop.f32.mrf.mxu0
        %v2185 = vadd.f32 %v1924, %v2184
        %v2186 = vpop.f32.mrf.mxu0
        %v2187 = vadd.f32 %v1928, %v2186
        %2188 = vmatprep.mubr.bf16.mxu0 0
        %2189 = vmatmul.mubr.bf16.gmra.mxu0 %v1878
        %v2190 = vpop.f32.mrf.mxu0
        %v2191 = vadd.f32 %v1924, %v2190
        %v2192 = vpop.f32.mrf.mxu0
        %v2193 = vadd.f32 %v1928, %v2192
        %v2194 = vpop.f32.mrf.mxu0
        %v2195 = vadd.f32 %v1924, %v2194
        %v2196 = vpop.f32.mrf.mxu0
        %v2197 = vadd.f32 %v1928, %v2196
        %2198 = vdwg.mxu0
        %v2199 = vmul.f32 %v2128, %v2128
        %v2200 = vmul.f32 %v2130, %v2130
        %v2201 = vmul.f32 %v2181, %v2181
        %v2202 = vmul.f32 %v2183, %v2183
        %v2203 = vmul.f32 %v2132, %v2132
        %v2204 = vmul.f32 %v2134, %v2134
        %v2205 = vmul.f32 %v2185, %v2185
        %v2206 = vmul.f32 %v2187, %v2187
        %v2207 = vmul.f32 %v2138, %v2138
        %v2208 = vmul.f32 %v2140, %v2140
        %v2209 = vmul.f32 %v2191, %v2191
        %v2210 = vmul.f32 %v2193, %v2193
        %v2211 = vmul.f32 %v2142, %v2142
        %v2212 = vmul.f32 %v2144, %v2144
        %v2213 = vmul.f32 %v2195, %v2195
        %v2214 = vmul.f32 %v2197, %v2197
        %v2215 = vmul.f32 %v2128, %v2199
        %v2216 = vmul.f32 %v2130, %v2200
        %v2217 = vmul.f32 %v2181, %v2201
        %v2218 = vmul.f32 %v2183, %v2202
        %v2219 = vmul.f32 %v2132, %v2203
        %v2220 = vmul.f32 %v2134, %v2204
        %v2221 = vmul.f32 %v2185, %v2205
        %v2222 = vmul.f32 %v2187, %v2206
        %v2223 = vmul.f32 %v2138, %v2207
        %v2224 = vmul.f32 %v2140, %v2208
        %v2225 = vmul.f32 %v2191, %v2209
        %v2226 = vmul.f32 %v2193, %v2210
        %v2227 = vmul.f32 %v2142, %v2211
        %v2228 = vmul.f32 %v2144, %v2212
        %v2229 = vmul.f32 %v2195, %v2213
        %v2230 = vmul.f32 %v2197, %v2214
        %v2231 = vmul.f32 %v2215, 0.044715
        %v2232 = vmul.f32 %v2216, 0.044715
        %v2233 = vmul.f32 %v2217, 0.044715
        %v2234 = vmul.f32 %v2218, 0.044715
        %v2235 = vmul.f32 %v2219, 0.044715
        %v2236 = vmul.f32 %v2220, 0.044715
        %v2237 = vmul.f32 %v2221, 0.044715
        %v2238 = vmul.f32 %v2222, 0.044715
        %v2239 = vmul.f32 %v2223, 0.044715
        %v2240 = vmul.f32 %v2224, 0.044715
        %v2241 = vmul.f32 %v2225, 0.044715
        %v2242 = vmul.f32 %v2226, 0.044715
        %v2243 = vmul.f32 %v2227, 0.044715
        %v2244 = vmul.f32 %v2228, 0.044715
        %v2245 = vmul.f32 %v2229, 0.044715
        %v2246 = vmul.f32 %v2230, 0.044715
        %v2247 = vadd.f32 %v2128, %v2231
        %v2248 = vadd.f32 %v2130, %v2232
        %v2249 = vadd.f32 %v2181, %v2233
        %v2250 = vadd.f32 %v2183, %v2234
        %v2251 = vadd.f32 %v2132, %v2235
        %v2252 = vadd.f32 %v2134, %v2236
        %v2253 = vadd.f32 %v2185, %v2237
        %v2254 = vadd.f32 %v2187, %v2238
        %v2255 = vadd.f32 %v2138, %v2239
        %v2256 = vadd.f32 %v2140, %v2240
        %v2257 = vadd.f32 %v2191, %v2241
        %v2258 = vadd.f32 %v2193, %v2242
        %v2259 = vadd.f32 %v2142, %v2243
        %v2260 = vadd.f32 %v2144, %v2244
        %v2261 = vadd.f32 %v2195, %v2245
        %v2262 = vadd.f32 %v2197, %v2246
        %v2263 = vmul.f32 %v2247, 0.7978846
        %v2264 = vmul.f32 %v2248, 0.7978846
        %v2265 = vmul.f32 %v2249, 0.7978846
        %v2266 = vmul.f32 %v2250, 0.7978846
        %v2267 = vmul.f32 %v2251, 0.7978846
        %v2268 = vmul.f32 %v2252, 0.7978846
        %v2269 = vmul.f32 %v2253, 0.7978846
        %v2270 = vmul.f32 %v2254, 0.7978846
        %v2271 = vmul.f32 %v2255, 0.7978846
        %v2272 = vmul.f32 %v2256, 0.7978846
        %v2273 = vmul.f32 %v2257, 0.7978846
        %v2274 = vmul.f32 %v2258, 0.7978846
        %v2275 = vmul.f32 %v2259, 0.7978846
        %v2276 = vmul.f32 %v2260, 0.7978846
        %v2277 = vmul.f32 %v2261, 0.7978846
        %v2278 = vmul.f32 %v2262, 0.7978846
        %v2279 = vtanh.pop %v2263
        %v2280 = vtanh.pop %v2264
        %v2281 = vtanh.pop %v2265
        %v2282 = vtanh.pop %v2266
        %v2283 = vtanh.pop %v2267
        %v2284 = vtanh.pop %v2268
        %v2285 = vtanh.pop %v2269
        %v2286 = vtanh.pop %v2270
        %v2287 = vtanh.pop %v2271
        %v2288 = vtanh.pop %v2272
        %v2289 = vtanh.pop %v2273
        %v2290 = vtanh.pop %v2274
        %v2291 = vtanh.pop %v2275
        %v2292 = vtanh.pop %v2276
        %v2293 = vtanh.pop %v2277
        %v2294 = vtanh.pop %v2278
        %v2295 = vadd.f32 %v2279, 1.0
        %v2296 = vadd.f32 %v2280, 1.0
        %v2297 = vadd.f32 %v2281, 1.0
        %v2298 = vadd.f32 %v2282, 1.0
        %v2299 = vadd.f32 %v2283, 1.0
        %v2300 = vadd.f32 %v2284, 1.0
        %v2301 = vadd.f32 %v2285, 1.0
        %v2302 = vadd.f32 %v2286, 1.0
        %v2303 = vadd.f32 %v2287, 1.0
        %v2304 = vadd.f32 %v2288, 1.0
        %v2305 = vadd.f32 %v2289, 1.0
        %v2306 = vadd.f32 %v2290, 1.0
        %v2307 = vadd.f32 %v2291, 1.0
        %v2308 = vadd.f32 %v2292, 1.0
        %v2309 = vadd.f32 %v2293, 1.0
        %v2310 = vadd.f32 %v2294, 1.0
        %v2311 = vmul.f32 %v2295, 0.5
        %v2312 = vmul.f32 %v2296, 0.5
        %v2313 = vmul.f32 %v2297, 0.5
        %v2314 = vmul.f32 %v2298, 0.5
        %v2315 = vmul.f32 %v2299, 0.5
        %v2316 = vmul.f32 %v2300, 0.5
        %v2317 = vmul.f32 %v2301, 0.5
        %v2318 = vmul.f32 %v2302, 0.5
        %v2319 = vmul.f32 %v2303, 0.5
        %v2320 = vmul.f32 %v2304, 0.5
        %v2321 = vmul.f32 %v2305, 0.5
        %v2322 = vmul.f32 %v2306, 0.5
        %v2323 = vmul.f32 %v2307, 0.5
        %v2324 = vmul.f32 %v2308, 0.5
        %v2325 = vmul.f32 %v2309, 0.5
        %v2326 = vmul.f32 %v2310, 0.5
        %v2327 = vmul.f32 %v2128, %v2311
        %v2328 = vmul.f32 %v2130, %v2312
        %v2329 = vmul.f32 %v2181, %v2313
        %v2330 = vmul.f32 %v2183, %v2314
        %v2331 = vmul.f32 %v2132, %v2315
        %v2332 = vmul.f32 %v2134, %v2316
        %v2333 = vmul.f32 %v2185, %v2317
        %v2334 = vmul.f32 %v2187, %v2318
        %v2335 = vmul.f32 %v2138, %v2319
        %v2336 = vmul.f32 %v2140, %v2320
        %v2337 = vmul.f32 %v2191, %v2321
        %v2338 = vmul.f32 %v2193, %v2322
        %v2339 = vmul.f32 %v2142, %v2323
        %v2340 = vmul.f32 %v2144, %v2324
        %v2341 = vmul.f32 %v2195, %v2325
        %v2342 = vmul.f32 %v2197, %v2326
        %v2343 = vpack.c.bf16 %v2331, %v2327
        %v2344 = vpack.c.bf16 %v2332, %v2328
        %v2345 = vpack.c.bf16 %v2333, %v2329
        %v2346 = vpack.c.bf16 %v2334, %v2330
        %v2347 = vpack.c.bf16 %v2339, %v2335
        %v2348 = vpack.c.bf16 %v2340, %v2336
        %v2349 = vpack.c.bf16 %v2341, %v2337
        %v2350 = vpack.c.bf16 %v2342, %v2338
        %v2351 = vld [vmem:[%s711] sm:$0xf]
        %v2352 = vld [vmem:[%s711 + $0x4] sm:$0xf]
        %v2353 = vld [vmem:[%s711 + $0x8] sm:$0xf]
        %v2354 = vld [vmem:[%s711 + $0xc] sm:$0xf]
        %v2355 = vld [vmem:[%s711 + $0x10] sm:$0xf]
        %v2356 = vld [vmem:[%s711 + $0x14] sm:$0xf]
        %v2357 = vld [vmem:[%s711 + $0x18] sm:$0xf]
        %v2358 = vld [vmem:[%s711 + $0x1c] sm:$0xf]
        %v2359 = vld [vmem:[%s711 + $0x20] sm:$0xf]
        %v2360 = vld [vmem:[%s711 + $0x24] sm:$0xf]
        %v2361 = vld [vmem:[%s711 + $0x28] sm:$0xf]
        %v2362 = vld [vmem:[%s711 + $0x2c] sm:$0xf]
        %v2363 = vld [vmem:[%s711 + $0x30] sm:$0xf]
        %v2364 = vld [vmem:[%s711 + $0x34] sm:$0xf]
        %v2365 = vld [vmem:[%s711 + $0x38] sm:$0xf]
        %v2366 = vld [vmem:[%s711 + $0x3c] sm:$0xf]
        %v2367 = vld [vmem:[%s711 + $0x40] sm:$0xf]
        %v2368 = vld [vmem:[%s711 + $0x44] sm:$0xf]
        %v2369 = vld [vmem:[%s711 + $0x48] sm:$0xf]
        %v2370 = vld [vmem:[%s711 + $0x4c] sm:$0xf]
        %v2371 = vld [vmem:[%s711 + $0x50] sm:$0xf]
        %v2372 = vld [vmem:[%s711 + $0x54] sm:$0xf]
        %v2373 = vld [vmem:[%s711 + $0x58] sm:$0xf]
        %v2374 = vld [vmem:[%s711 + $0x5c] sm:$0xf]
        %v2375 = vld [vmem:[%s711 + $0x60] sm:$0xf]
        %v2376 = vld [vmem:[%s711 + $0x64] sm:$0xf]
        %v2377 = vld [vmem:[%s711 + $0x68] sm:$0xf]
        %v2378 = vld [vmem:[%s711 + $0x6c] sm:$0xf]
        %v2379 = vld [vmem:[%s711 + $0x70] sm:$0xf]
        %v2380 = vld [vmem:[%s711 + $0x74] sm:$0xf]
        %v2381 = vld [vmem:[%s711 + $0x78] sm:$0xf]
        %v2382 = vld [vmem:[%s711 + $0x7c] sm:$0xf]
        %v2383 = vld [vmem:[%s711 + $0x80] sm:$0xf]
        %v2384 = vld [vmem:[%s711 + $0x84] sm:$0xf]
        %v2385 = vld [vmem:[%s711 + $0x88] sm:$0xf]
        %v2386 = vld [vmem:[%s711 + $0x8c] sm:$0xf]
        %v2387 = vld [vmem:[%s711 + $0x90] sm:$0xf]
        %v2388 = vld [vmem:[%s711 + $0x94] sm:$0xf]
        %v2389 = vld [vmem:[%s711 + $0x98] sm:$0xf]
        %v2390 = vld [vmem:[%s711 + $0x9c] sm:$0xf]
        %v2391 = vld [vmem:[%s711 + $0xa0] sm:$0xf]
        %v2392 = vld [vmem:[%s711 + $0xa4] sm:$0xf]
        %v2393 = vld [vmem:[%s711 + $0xa8] sm:$0xf]
        %v2394 = vld [vmem:[%s711 + $0xac] sm:$0xf]
        %v2395 = vld [vmem:[%s711 + $0xb0] sm:$0xf]
        %v2396 = vld [vmem:[%s711 + $0xb4] sm:$0xf]
        %v2397 = vld [vmem:[%s711 + $0xb8] sm:$0xf]
        %v2398 = vld [vmem:[%s711 + $0xbc] sm:$0xf]
        %v2399 = vld [vmem:[%s711 + $0xc0] sm:$0xf]
        %v2400 = vld [vmem:[%s711 + $0xc4] sm:$0xf]
        %v2401 = vld [vmem:[%s711 + $0xc8] sm:$0xf]
        %v2402 = vld [vmem:[%s711 + $0xcc] sm:$0xf]
        %v2403 = vld [vmem:[%s711 + $0xd0] sm:$0xf]
        %v2404 = vld [vmem:[%s711 + $0xd4] sm:$0xf]
        %v2405 = vld [vmem:[%s711 + $0xd8] sm:$0xf]
        %v2406 = vld [vmem:[%s711 + $0xdc] sm:$0xf]
        %v2407 = vld [vmem:[%s711 + $0xe0] sm:$0xf]
        %v2408 = vld [vmem:[%s711 + $0xe4] sm:$0xf]
        %v2409 = vld [vmem:[%s711 + $0xe8] sm:$0xf]
        %v2410 = vld [vmem:[%s711 + $0xec] sm:$0xf]
        %v2411 = vld [vmem:[%s711 + $0xf0] sm:$0xf]
        %v2412 = vld [vmem:[%s711 + $0xf4] sm:$0xf]
        %v2413 = vld [vmem:[%s711 + $0xf8] sm:$0xf]
        %v2414 = vld [vmem:[%s711 + $0xfc] sm:$0xf]
        %v2415 = vld [vmem:[%s818] sm:$0x1]
        %v2417 = vlaneseq
        %v2418 = vshrl.u32 %v2417, 7
        %v2419 = vsub.s32 0, %v2418
        %v2420 = vrot.slane %v2415, %v2419
        %v2486 = vunpack.c.l.b16 %v2351
        %v2487 = vunpack.c.l.b16 %v2352
        %v2488 = vunpack.c.l.b16 %v2353
        %v2489 = vunpack.c.l.b16 %v2354
        %v2490 = vunpack.c.l.b16 %v2355
        %v2491 = vunpack.c.l.b16 %v2356
        %v2492 = vunpack.c.l.b16 %v2357
        %v2493 = vunpack.c.l.b16 %v2358
        %v2494 = vunpack.c.l.b16 %v2359
        %v2495 = vunpack.c.l.b16 %v2360
        %v2496 = vunpack.c.l.b16 %v2361
        %v2497 = vunpack.c.l.b16 %v2362
        %v2498 = vunpack.c.l.b16 %v2363
        %v2499 = vunpack.c.l.b16 %v2364
        %v2500 = vunpack.c.l.b16 %v2365
        %v2501 = vunpack.c.l.b16 %v2366
        %v2502 = vunpack.c.l.b16 %v2367
        %v2503 = vunpack.c.l.b16 %v2368
        %v2504 = vunpack.c.l.b16 %v2369
        %v2505 = vunpack.c.l.b16 %v2370
        %v2506 = vunpack.c.l.b16 %v2371
        %v2507 = vunpack.c.l.b16 %v2372
        %v2508 = vunpack.c.l.b16 %v2373
        %v2509 = vunpack.c.l.b16 %v2374
        %v2510 = vunpack.c.l.b16 %v2375
        %v2511 = vunpack.c.l.b16 %v2376
        %v2512 = vunpack.c.l.b16 %v2377
        %v2513 = vunpack.c.l.b16 %v2378
        %v2514 = vunpack.c.l.b16 %v2379
        %v2515 = vunpack.c.l.b16 %v2380
        %v2516 = vunpack.c.l.b16 %v2381
        %v2517 = vunpack.c.l.b16 %v2382
        %v2518 = vunpack.c.l.b16 %v2383
        %v2519 = vunpack.c.l.b16 %v2384
        %v2520 = vunpack.c.l.b16 %v2385
        %v2521 = vunpack.c.l.b16 %v2386
        %v2522 = vunpack.c.l.b16 %v2387
        %v2523 = vunpack.c.l.b16 %v2388
        %v2524 = vunpack.c.l.b16 %v2389
        %v2525 = vunpack.c.l.b16 %v2390
        %v2526 = vunpack.c.l.b16 %v2391
        %v2527 = vunpack.c.l.b16 %v2392
        %v2528 = vunpack.c.l.b16 %v2393
        %v2529 = vunpack.c.l.b16 %v2394
        %v2530 = vunpack.c.l.b16 %v2395
        %v2531 = vunpack.c.l.b16 %v2396
        %v2532 = vunpack.c.l.b16 %v2397
        %v2533 = vunpack.c.l.b16 %v2398
        %v2534 = vunpack.c.l.b16 %v2399
        %v2535 = vunpack.c.l.b16 %v2400
        %v2536 = vunpack.c.l.b16 %v2401
        %v2537 = vunpack.c.l.b16 %v2402
        %v2538 = vunpack.c.l.b16 %v2403
        %v2539 = vunpack.c.l.b16 %v2404
        %v2540 = vunpack.c.l.b16 %v2405
        %v2541 = vunpack.c.l.b16 %v2406
        %v2542 = vunpack.c.l.b16 %v2407
        %v2543 = vunpack.c.l.b16 %v2408
        %v2544 = vunpack.c.l.b16 %v2409
        %v2545 = vunpack.c.l.b16 %v2410
        %v2546 = vunpack.c.l.b16 %v2411
        %v2547 = vunpack.c.l.b16 %v2412
        %v2548 = vunpack.c.l.b16 %v2413
        %v2549 = vunpack.c.l.b16 %v2414
        %v2550 = vpack.c.b16 %v2487, %v2486
        %v2551 = vpack.c.b16 %v2489, %v2488
        %v2552 = vpack.c.b16 %v2491, %v2490
        %v2553 = vpack.c.b16 %v2493, %v2492
        %v2554 = vpack.c.b16 %v2495, %v2494
        %v2555 = vpack.c.b16 %v2497, %v2496
        %v2556 = vpack.c.b16 %v2499, %v2498
        %v2557 = vpack.c.b16 %v2501, %v2500
        %v2558 = vpack.c.b16 %v2503, %v2502
        %v2559 = vpack.c.b16 %v2505, %v2504
        %v2560 = vpack.c.b16 %v2507, %v2506
        %v2561 = vpack.c.b16 %v2509, %v2508
        %v2562 = vpack.c.b16 %v2511, %v2510
        %v2563 = vpack.c.b16 %v2513, %v2512
        %v2564 = vpack.c.b16 %v2515, %v2514
        %v2565 = vpack.c.b16 %v2517, %v2516
        %v2566 = vpack.c.b16 %v2519, %v2518
        %v2567 = vpack.c.b16 %v2521, %v2520
        %v2568 = vpack.c.b16 %v2523, %v2522
        %v2569 = vpack.c.b16 %v2525, %v2524
        %v2570 = vpack.c.b16 %v2527, %v2526
        %v2571 = vpack.c.b16 %v2529, %v2528
        %v2572 = vpack.c.b16 %v2531, %v2530
        %v2573 = vpack.c.b16 %v2533, %v2532
        %v2574 = vpack.c.b16 %v2535, %v2534
        %v2575 = vpack.c.b16 %v2537, %v2536
        %v2576 = vpack.c.b16 %v2539, %v2538
        %v2577 = vpack.c.b16 %v2541, %v2540
        %v2578 = vpack.c.b16 %v2543, %v2542
        %v2579 = vpack.c.b16 %v2545, %v2544
        %v2580 = vpack.c.b16 %v2547, %v2546
        %v2581 = vpack.c.b16 %v2549, %v2548
        %2614 = vmatprep.subr.bf16.mxu0 0
        %2615 = vmatpush1.bf16.msra.mxu0 %v2557
        %2616 = vmatprep.subr.bf16.mxu0 0
        %2617 = vmatpush1.bf16.msra.mxu0 %v2556
        %2618 = vmatprep.subr.bf16.mxu0 0
        %2619 = vmatpush1.bf16.msra.mxu0 %v2555
        %2620 = vmatprep.subr.bf16.mxu0 0
        %2621 = vmatpush1.bf16.msra.mxu0 %v2554
        %2622 = vmatprep.subr.bf16.mxu0 0
        %2623 = vmatpush1.bf16.msra.mxu0 %v2553
        %2624 = vmatprep.subr.bf16.mxu0 0
        %2625 = vmatpush1.bf16.msra.mxu0 %v2552
        %2626 = vmatprep.subr.bf16.mxu0 0
        %2627 = vmatpush1.bf16.msra.mxu0 %v2551
        %2628 = vmatprep.subr.bf16.mxu0 0
        %2629 = vmatpush1.bf16.msra.mxu0 %v2550
        %2630 = vmatprep.subr.bf16.mxu0 0
        %2631 = vmatpush2.bf16.msra.mxu0 %v2565
        %2632 = vmatprep.subr.bf16.mxu0 0
        %2633 = vmatpush2.bf16.msra.mxu0 %v2564
        %2634 = vmatprep.subr.bf16.mxu0 0
        %2635 = vmatpush2.bf16.msra.mxu0 %v2563
        %2636 = vmatprep.subr.bf16.mxu0 0
        %2637 = vmatpush2.bf16.msra.mxu0 %v2562
        %2638 = vmatprep.subr.bf16.mxu0 0
        %2639 = vmatpush2.bf16.msra.mxu0 %v2561
        %2640 = vmatprep.subr.bf16.mxu0 0
        %2641 = vmatpush2.bf16.msra.mxu0 %v2560
        %2642 = vmatprep.subr.bf16.mxu0 0
        %2643 = vmatpush2.bf16.msra.mxu0 %v2559
        %2644 = vmatprep.subr.bf16.mxu0 0
        %2645 = vmatpush2.bf16.msra.mxu0 %v2558
        %2646 = vmatprep.mubr.bf16.mxu0 %v2344
        %2647 = vmatmul.mubr.bf16.gmra.mxu0 %v2343
        %v2648 = vpop.f32.mrf.mxu0
        %v2649 = vadd.f32 %v2420, %v2648
        %v2650 = vpop.f32.mrf.mxu0
        %v2651 = vpop.f32.mrf.mxu0
        %v2652 = vadd.f32 %v2420, %v2651
        %v2653 = vpop.f32.mrf.mxu0
        %2654 = vmatprep.mubr.bf16.mxu0 %v2348
        %2655 = vmatmul.mubr.bf16.gmra.mxu0 %v2347
        %v2656 = vpop.f32.mrf.mxu0
        %v2657 = vadd.f32 %v2420, %v2656
        %v2658 = vpop.f32.mrf.mxu0
        %v2659 = vpop.f32.mrf.mxu0
        %v2660 = vadd.f32 %v2420, %v2659
        %v2661 = vpop.f32.mrf.mxu0
        %2662 = vdwg.mxu0
        %2663 = vmatprep.subr.bf16.mxu0 0
        %2664 = vmatpush1.bf16.msra.mxu0 %v2573
        %2665 = vmatprep.subr.bf16.mxu0 0
        %2666 = vmatpush1.bf16.msra.mxu0 %v2572
        %2667 = vmatprep.subr.bf16.mxu0 0
        %2668 = vmatpush1.bf16.msra.mxu0 %v2571
        %2669 = vmatprep.subr.bf16.mxu0 0
        %2670 = vmatpush1.bf16.msra.mxu0 %v2570
        %2671 = vmatprep.subr.bf16.mxu0 0
        %2672 = vmatpush1.bf16.msra.mxu0 %v2569
        %2673 = vmatprep.subr.bf16.mxu0 0
        %2674 = vmatpush1.bf16.msra.mxu0 %v2568
        %2675 = vmatprep.subr.bf16.mxu0 0
        %2676 = vmatpush1.bf16.msra.mxu0 %v2567
        %2677 = vmatprep.subr.bf16.mxu0 0
        %2678 = vmatpush1.bf16.msra.mxu0 %v2566
        %2679 = vmatprep.subr.bf16.mxu0 0
        %2680 = vmatpush2.bf16.msra.mxu0 %v2581
        %2681 = vmatprep.subr.bf16.mxu0 0
        %2682 = vmatpush2.bf16.msra.mxu0 %v2580
        %2683 = vmatprep.subr.bf16.mxu0 0
        %2684 = vmatpush2.bf16.msra.mxu0 %v2579
        %2685 = vmatprep.subr.bf16.mxu0 0
        %2686 = vmatpush2.bf16.msra.mxu0 %v2578
        %2687 = vmatprep.subr.bf16.mxu0 0
        %2688 = vmatpush2.bf16.msra.mxu0 %v2577
        %2689 = vmatprep.subr.bf16.mxu0 0
        %2690 = vmatpush2.bf16.msra.mxu0 %v2576
        %2691 = vmatprep.subr.bf16.mxu0 0
        %2692 = vmatpush2.bf16.msra.mxu0 %v2575
        %2693 = vmatprep.subr.bf16.mxu0 0
        %2694 = vmatpush2.bf16.msra.mxu0 %v2574
        %2695 = vmatprep.mubr.bf16.mxu0 %v2346
        %2696 = vmatmul.mubr.bf16.gmra.mxu0 %v2345
        %v2697 = vpop.f32.mrf.mxu0
        %v2698 = vadd.f32 %v2649, %v2697
        %v2699 = vpop.f32.mrf.mxu0
        %v2700 = vpop.f32.mrf.mxu0
        %v2701 = vadd.f32 %v2652, %v2700
        %v2702 = vpop.f32.mrf.mxu0
        %2703 = vmatprep.mubr.bf16.mxu0 %v2350
        %2704 = vmatmul.mubr.bf16.gmra.mxu0 %v2349
        %v2705 = vpop.f32.mrf.mxu0
        %v2706 = vadd.f32 %v2657, %v2705
        %v2707 = vpop.f32.mrf.mxu0
        %v2708 = vpop.f32.mrf.mxu0
        %v2709 = vadd.f32 %v2660, %v2708
        %v2710 = vpop.f32.mrf.mxu0
        %2711 = vdwg.mxu0
        %v2712 = vadd.f32 %v1807, %v2698
        %v2713 = vadd.f32 %v1808, %v2701
        %v2714 = vadd.f32 %v1809, %v2706
        %v2715 = vadd.f32 %v1810, %v2709
        %2716 = vst [vmem:[#allocation2] sm:$0xff] %v2712
        %2717 = vst [vmem:[#allocation2 + $0x8] sm:$0xff] %v2713
        %2718 = vst [vmem:[#allocation2 + $0x10] sm:$0xff] %v2714
        %2719 = vst [vmem:[#allocation2 + $0x18] sm:$0xff] %v2715
        %p2720 = scmp.eq.s32.totalorder %s47, 1
        // Predicated region
        $region113: #{tpu_custom_call.1} parent=71 // pred_check
          %p2721 = pneg %p2720
        $region114: #{tpu_custom_call.1} parent=71 // pred_check_branch
          %2723 = sbr.rel (%p2721) target = $region116
        $region115: #{tpu_custom_call.1} parent=71 // pred_region
          %2724 = vst [vmem:[%s803] sm:$0xff] %v2712
          %2725 = vst [vmem:[%s803 + $0x8] sm:$0xff] %v2713
          %2726 = vst [vmem:[%s803 + $0x10] sm:$0xff] %v2714
          %2727 = vst [vmem:[%s803 + $0x18] sm:$0xff] %v2715
        $region116: #{tpu_custom_call.1} parent=71 // pred_fallthru
          _
        %s2728 = sand.u32 %s400, 1
        %s2729 = scalar_lea.sflag [#allocation5], %s2728
        %s2730 = sand.u32 %s400, 1
        %s2731 = smul.addr %s2730, 32
        %s2732 = scalar_lea.vmem [#allocation18], %s2731
        // Predicated region
        $region117: #{tpu_custom_call.1} parent=71 // pred_check
          %p2733 = pneg %p410
        $region118: #{tpu_custom_call.1} parent=71 // pred_check_branch
          %2735 = sbr.rel (%p2733) target = $region120
        $region119: #{tpu_custom_call.1} parent=71 // pred_region
          %s2736 = smul.u32 2, %s46
          %s2738 = ssub.s32 512, 512
          %2739 = vsyncadd %s2729, %s2738
          %s2740 = smul.addr %s2736, 2
          %s2741 = smul.addr %s2740, 128
          %s2742 = scalar_lea.hbm %s13, %s2741
          %s2743 = sshll.u32 %s2732, 4
          %s2744 = int_to_ptr.vmem [resolvable:$true] %s2743
          %2749 = dma.vmem_to_hbm [thread:$0]  %s2744, 512, %s2742, %s2729, 128, 128, 8
        $region120: #{tpu_custom_call.1} parent=71 // pred_fallthru
          _
      $region72: #{tpu_custom_call.1} parent=5 // pred_fallthru
        _
      %p2750 = scmp.le.s32.totalorder 2, %s37
      // Predicated region
      $region121: #{tpu_custom_call.1} parent=5 // pred_check
        %p2751 = pneg %p2750
      $region122: #{tpu_custom_call.1} parent=5 // pred_check_branch
        %2753 = sbr.rel (%p2751) target = $region124
      $region123: #{tpu_custom_call.1} parent=5 // pred_region
        %s2754 = ssub.s32 %s37, 2
        // Predicated region
        $region125: #{tpu_custom_call.1} parent=123 // pred_check
          %p2755 = pneg %p416
        $region126: #{tpu_custom_call.1} parent=123 // pred_check_branch
          %2757 = sbr.rel (%p2755) target = $region128
        $region127: #{tpu_custom_call.1} parent=123 // pred_region
          %s2758 = sand.u32 %s401, 1
          %s2759 = scalar_lea.sflag [#allocation5], %s2758
          %s2760 = sand.u32 %s401, 1
          %s2761 = smul.addr %s2760, 32
          %s2762 = scalar_lea.vmem [#allocation18], %s2761
          %2763 = dma.done %s2759, 512
        $region128: #{tpu_custom_call.1} parent=123 // pred_fallthru
          _
      $region124: #{tpu_custom_call.1} parent=5 // pred_fallthru
        _
    $region6: #{tpu_custom_call.1} parent=1 // loop_footer
      %s41 = sadd.s32 1, %s37
    $region7: #{tpu_custom_call.1} parent=1 // loop_footer_branch
      %36 = sbr.rel target = $region3
    $region8: #{tpu_custom_call.1} parent=1 // loop_exit
      _
    %2764 = vsyncpa [#allocation4], 1
    %s2765 = scalar_lea.sflag [#allocation4], 1
    %2766 = vsyncpa %s2765, 1
    %2767 = vsyncpa [#allocation7], 1
    %s2768 = scalar_lea.sflag [#allocation7], 1
    %2769 = vsyncpa %s2768, 1
    %2770 = vsyncpa [#allocation10], 1
    %s2771 = scalar_lea.sflag [#allocation10], 1
    %2772 = vsyncpa %s2771, 1
    %2773 = vsyncpa [#allocation13], 1
    %s2774 = scalar_lea.sflag [#allocation13], 1
    %2775 = vsyncpa %s2774, 1
    %2776 = vsyncpa [#allocation16], 1
    %s2777 = scalar_lea.sflag [#allocation16], 1
    %2778 = vsyncpa %s2777, 1
    %2779 = vsyncpa [#allocation5], 1
    %s2780 = scalar_lea.sflag [#allocation5], 1
    %2781 = vsyncpa %s2780, 1

</llo_original>
